<compile_context>
chip_gen: v7x
topology: tpu7x:2x2x1
jax: 0.10.0
libtpu: 0.0.40
codegen_flags: <defaults>
</compile_context>

<pallas_src>
import jax
import jax.numpy as jnp
from jax import lax
from jax.experimental import pallas as pl
from jax.experimental.pallas import tpu as pltpu


def _round_up(x, m):
    return ((x + m - 1) // m) * m


def _pick_tile(n, max_tile):
    t = max_tile
    while t >= 8:
        if t <= n and n % t == 0:
            return t
        t //= 2
    return n  # fall back to the full (untiled) axis


# ---------------------------------------------------------------------------
# Single-pass path (tk == N): fused projections + softmax + residual.
# ---------------------------------------------------------------------------
def _attn_single_pass_kernel(xq_ref, xkv_ref, wq_ref, bq_ref, wk_ref, bk_ref,
                             wv_ref, bv_ref, gamma_ref, o_ref, k_scr, v_scr):
    # K / V projections once per batch element: the qi axis is "arbitrary", so the
    # scratch written at qi == 0 persists for every q tile of this batch element,
    # and the (1, N, C) key-side x block (constant index over qi) is not re-streamed.
    @pl.when(pl.program_id(1) == 0)
    def _project_kv():
        xk = xkv_ref[0].astype(jnp.bfloat16)                           # (N, C)
        k = jnp.dot(xk, wk_ref[...], preferred_element_type=jnp.float32) + bk_ref[...]
        v = jnp.dot(xk, wv_ref[...], preferred_element_type=jnp.float32) + bv_ref[...]
        k_scr[...] = k.astype(jnp.bfloat16)                            # (N, C8p)
        v_scr[...] = v.astype(jnp.bfloat16)                            # (N, C)

    xq = xq_ref[0]                                                     # (tq, C) f32
    q = (jnp.dot(xq.astype(jnp.bfloat16), wq_ref[...],
                 preferred_element_type=jnp.float32) + bq_ref[...]).astype(jnp.bfloat16)

    # scores[i, j] = <q_i, k_j>: contract the last dims (trans-B), no k.T copy.
    s = lax.dot_general(q, k_scr[...], (((1,), (1,)), ((), ())),
                        preferred_element_type=jnp.float32)            # (tq, N)

    # Single-pass softmax over the full key axis (all f32; v5e-safe).
    m = jnp.max(s, axis=-1, keepdims=True)
    p = jnp.exp(s - m)
    l = jnp.sum(p, axis=-1, keepdims=True)
    out = jnp.dot(p.astype(jnp.bfloat16), v_scr[...],
                  preferred_element_type=jnp.float32)                  # (tq, C)
    out = out * pl.reciprocal(l, approx=True)                          # EUP vrcp
    o_ref[0] = gamma_ref[0] * out + xq                                 # gamma*attn + residual


# ---------------------------------------------------------------------------
# Flash path (online softmax) for large N; Q/K/V are precomputed in the wrapper.
# ---------------------------------------------------------------------------
def _attn_flash_kernel(xq_ref, q_ref, k_ref, v_ref, gamma_ref, o_ref,
                       m_scr, l_scr, acc_scr):
    ki = pl.program_id(2)

    @pl.when(ki == 0)
    def _init():
        m_scr[...] = jnp.full_like(m_scr, -jnp.inf)
        l_scr[...] = jnp.zeros_like(l_scr)
        acc_scr[...] = jnp.zeros_like(acc_scr)

    s = lax.dot_general(q_ref[0], k_ref[0], (((1,), (1,)), ((), ())),
                        preferred_element_type=jnp.float32)            # (tq, tk)

    m_prev = m_scr[...]
    m_new = jnp.maximum(m_prev, jnp.max(s, axis=-1, keepdims=True))
    alpha = jnp.exp(m_prev - m_new)                                    # (tq, 1)
    p = jnp.exp(s - m_new)                                             # (tq, tk) f32
    l_scr[...] = alpha * l_scr[...] + jnp.sum(p, axis=-1, keepdims=True)
    acc_scr[...] = alpha * acc_scr[...] + jnp.dot(
        p.astype(jnp.bfloat16), v_ref[0], preferred_element_type=jnp.float32)
    m_scr[...] = m_new

    @pl.when(ki == pl.num_programs(2) - 1)
    def _finalize():
        inv_l = pl.reciprocal(l_scr[...], approx=True)
        o_ref[0] = gamma_ref[0] * (acc_scr[...] * inv_l) + xq_ref[0]


def attention_block_pallas(x_nchw, wq, bq, wk, bk, wv, bv, gamma, *,
                           single_pass_max_n=2048, max_tq=512, max_tk=512):
    """x_nchw: (B, C, H, W) f32.  wq/wk: (C, C//8), wv: (C, C) stored as (C_in, C_out)
    for x @ W (the 1x1-conv weights transposed); b*: biases; gamma: (1,)."""
    B, C, H, W = x_nchw.shape
    N = H * W
    C8 = wq.shape[1]
    C8p = _round_up(C8, 128)

    # NCHW -> (B, N, C) with n = h*W + w (matches torch .view(B, -1, W*H)).
    # TODO(synk): keeping the surrounding model NHWC would remove this transpose and
    # the inverse one on the output -- they are the only wrapper HBM passes left.
    x_bnc = jnp.transpose(x_nchw, (0, 2, 3, 1)).reshape(B, N, C)

    # Only the tiny q/k weights are zero-padded (lane-dense scores contraction).
    wq_p = jnp.pad(wq, ((0, 0), (0, C8p - C8))).astype(jnp.float32)
    wk_p = jnp.pad(wk, ((0, 0), (0, C8p - C8))).astype(jnp.float32)
    bq_p = jnp.pad(bq, (0, C8p - C8)).reshape(1, C8p).astype(jnp.float32)
    bk_p = jnp.pad(bk, (0, C8p - C8)).reshape(1, C8p).astype(jnp.float32)
    bv_r = bv.reshape(1, C).astype(jnp.float32)
    gamma_f32 = gamma.astype(jnp.float32)

    if N <= single_pass_max_n:
        # ----------------------------- single-pass -----------------------------
        # Size tq against a ~6 MiB budget for the (tq, N) f32 score tile (+ exp
        # temporaries) so everything stays inside scoped-VMEM defaults on v5e/v6e/v7x.
        tq_cap = max_tq
        while tq_cap > 8 and tq_cap * N * 10 > 6 * 1024 * 1024:
            tq_cap //= 2
        tq = _pick_tile(N, tq_cap)
        grid = (B, N // tq)

        cost = pl.CostEstimate(
            flops=int(B * (2 * N * C * (2 * C8p + C) + 2 * N * N * (C8p + C))),
            transcendentals=int(B * N * N),
            bytes_accessed=int(4 * B * N * C * 3                 # x (q side + kv side) + out
                               + 4 * (wq_p.size + wk_p.size + wv.size)),
        )

        grid_spec = pltpu.PrefetchScalarGridSpec(
            num_scalar_prefetch=0,
            grid=grid,
            in_specs=[
                pl.BlockSpec((1, tq, C), lambda b, qi: (b, qi, 0)),   # x: query rows + residual
                pl.BlockSpec((1, N, C), lambda b, qi: (b, 0, 0)),     # x: key/value rows (per b)
                pl.BlockSpec((C, C8p), lambda b, qi: (0, 0)),         # Wq (VMEM resident)
                pl.BlockSpec((1, C8p), lambda b, qi: (0, 0)),         # bq
                pl.BlockSpec((C, C8p), lambda b, qi: (0, 0)),         # Wk
                pl.BlockSpec((1, C8p), lambda b, qi: (0, 0)),         # bk
                pl.BlockSpec((C, C), lambda b, qi: (0, 0)),           # Wv
                pl.BlockSpec((1, C), lambda b, qi: (0, 0)),           # bv
                pl.BlockSpec(memory_space=pltpu.MemorySpace.SMEM),    # gamma scalar
            ],
            out_specs=pl.BlockSpec((1, tq, C), lambda b, qi: (b, qi, 0)),
            scratch_shapes=[
                pltpu.VMEM((N, C8p), jnp.bfloat16),   # K, projected once per batch element
                pltpu.VMEM((N, C), jnp.bfloat16),     # V, projected once per batch element
            ],
        )

        out_bnc = pl.pallas_call(
            _attn_single_pass_kernel,
            out_shape=jax.ShapeDtypeStruct((B, N, C), jnp.float32),
            grid_spec=grid_spec,
            compiler_params=pltpu.CompilerParams(
                # b parallel (megacore shards batch); qi must stay "arbitrary" since
                # the K/V scratch written at qi == 0 is reused by later q tiles.
                dimension_semantics=("parallel", "arbitrary")),
            cost_estimate=cost,
        )(x_bnc, x_bnc, wq_p.astype(jnp.bfloat16), bq_p,
          wk_p.astype(jnp.bfloat16), bk_p, wv.astype(jnp.bfloat16), bv_r,
          gamma_f32)
    else:
        # ------------------------------- flash ---------------------------------
        # Projections hoisted entirely out of the (qi, ki) loop: computed once here
        # (reviewer-sanctioned) and streamed as bf16 (half the re-streamed bytes).
        q_all = (jnp.einsum("bnc,cd->bnd", x_bnc, wq_p) + bq_p).astype(jnp.bfloat16)
        k_all = (jnp.einsum("bnc,cd->bnd", x_bnc, wk_p) + bk_p).astype(jnp.bfloat16)
        v_all = (jnp.einsum("bnc,cd->bnd", x_bnc, wv) + bv_r).astype(jnp.bfloat16)

        tq = _pick_tile(N, max_tq)
        tk = _pick_tile(N, max_tk)
        num_q = N // tq
        grid = (B, num_q, N // tk)

        cost = pl.CostEstimate(
            flops=int(B * 2 * N * N * (C8p + C)),
            transcendentals=int(B * N * N),
            bytes_accessed=int(2 * B * N * C8p                      # Q
                               + num_q * 2 * B * N * (C8p + C)      # K/V re-streamed per q tile
                               + 4 * B * N * C * 2),                # x residual + output
        )

        grid_spec = pltpu.PrefetchScalarGridSpec(
            num_scalar_prefetch=0,
            grid=grid,
            in_specs=[
                pl.BlockSpec((1, tq, C), lambda b, qi, ki: (b, qi, 0)),    # x residual
                pl.BlockSpec((1, tq, C8p), lambda b, qi, ki: (b, qi, 0)),  # Q
                pl.BlockSpec((1, tk, C8p), lambda b, qi, ki: (b, ki, 0)),  # K
                pl.BlockSpec((1, tk, C), lambda b, qi, ki: (b, ki, 0)),    # V
                pl.BlockSpec(memory_space=pltpu.MemorySpace.SMEM),         # gamma scalar
            ],
            out_specs=pl.BlockSpec((1, tq, C), lambda b, qi, ki: (b, qi, 0)),
            scratch_shapes=[
                pltpu.VMEM((tq, 1), jnp.float32),     # running max m
                pltpu.VMEM((tq, 1), jnp.float32),     # running denom l
                pltpu.VMEM((tq, C), jnp.float32),     # output accumulator
            ],
        )

        out_bnc = pl.pallas_call(
            _attn_flash_kernel,
            out_shape=jax.ShapeDtypeStruct((B, N, C), jnp.float32),
            grid_spec=grid_spec,
            compiler_params=pltpu.CompilerParams(
                dimension_semantics=("parallel", "parallel", "arbitrary")),
            cost_estimate=cost,
        )(x_bnc, q_all, k_all, v_all, gamma_f32)

    return jnp.transpose(out_bnc.reshape(B, H, W, C), (0, 3, 1, 2))


def attention_block_ref(x_nchw, wq, bq, wk, bk, wv, bv, gamma):
    """Pure-JAX f32 reference mirroring the PyTorch forward."""
    B, C, H, W = x_nchw.shape
    N = H * W
    x_bnc = jnp.transpose(x_nchw, (0, 2, 3, 1)).reshape(B, N, C)
    q = x_bnc @ wq + bq                                   # (B, N, C8)
    k = x_bnc @ wk + bk                                   # (B, N, C8)
    v = x_bnc @ wv + bv                                   # (B, N, C)
    energy = jnp.einsum("bnc,bmc->bnm", q, k)             # (B, N, N)
    attn = jax.nn.softmax(energy, axis=-1)
    out = jnp.einsum("bnm,bmc->bnc", attn, v)             # (B, N, C)
    y = gamma[0] * out + x_bnc
    return jnp.transpose(y.reshape(B, H, W, C), (0, 3, 1, 2))


if __name__ == "__main__":
    # Shapes consistent with the module: C divisible by 8; N = 256.
    B, C, H, W = 2, 32, 16, 16
    C8 = C // 8

    key = jax.random.PRNGKey(0)
    kx, kwq, kbq, kwk, kbk, kwv, kbv, kg = jax.random.split(key, 8)

    x = jax.random.normal(kx, (B, C, H, W), dtype=jnp.float32)
    # Conv2d(C, C8, kernel_size=1) weights stored as (C_in, C_out) for x @ W.
    wq = 0.1 * jax.random.normal(kwq, (C, C8), dtype=jnp.float32)
    bq = 0.1 * jax.random.normal(kbq, (C8,), dtype=jnp.float32)
    wk = 0.1 * jax.random.normal(kwk, (C, C8), dtype=jnp.float32)
    bk = 0.1 * jax.random.normal(kbk, (C8,), dtype=jnp.float32)
    wv = 0.1 * jax.random.normal(kwv, (C, C), dtype=jnp.float32)
    bv = 0.1 * jax.random.normal(kbv, (C,), dtype=jnp.float32)
    # nn.Parameter(torch.zeros(1)) in the module; nonzero here so the attention
    # path actually contributes under test.
    gamma = 0.5 + 0.1 * jax.random.normal(kg, (1,), dtype=jnp.float32)

    y_ref = attention_block_ref(x, wq, bq, wk, bk, wv, bv, gamma)

    # Main path: fused single-pass kernel (tk == N, K/V projected once per b).
    y = attention_block_pallas(x, wq, bq, wk, bk, wv, bv, gamma)
    y = jax.block_until_ready(y)
    assert y.shape == (B, C, H, W)
    err = float(jnp.max(jnp.abs(y - y_ref)))
    assert jnp.allclose(y, y_ref, atol=3e-2, rtol=3e-2), (
        f"single-pass mismatch vs reference (max abs err {err})")

    # Large-N fallback (online softmax over key tiles), forced at a small shape
    # so it also gets compile/run coverage (grid (2, 2, 2): multi-qi, multi-ki).
    y2 = attention_block_pallas(x, wq, bq, wk, bk, wv, bv, gamma,
                                single_pass_max_n=0, max_tq=128, max_tk=128)
    y2 = jax.block_until_ready(y2)
    err2 = float(jnp.max(jnp.abs(y2 - y_ref)))
    assert jnp.allclose(y2, y_ref, atol=3e-2, rtol=3e-2), (
        f"flash-path mismatch vs reference (max abs err {err2})")

    print("KERNEL_OK")
</pallas_src>

<mosaic_0001>
module attributes {stable_mosaic.version = 11 : i64} {
  func.func @_attn_single_pass_kernel(%arg0: i32, %arg1: i32, %arg2: memref<1x256x32xf32, #tpu.memory_space<vmem>>, %arg3: memref<1x256x32xf32, #tpu.memory_space<vmem>>, %arg4: memref<32x128xbf16, #tpu.memory_space<vmem>>, %arg5: memref<1x128xf32, #tpu.memory_space<vmem>>, %arg6: memref<32x128xbf16, #tpu.memory_space<vmem>>, %arg7: memref<1x128xf32, #tpu.memory_space<vmem>>, %arg8: memref<32x32xbf16, #tpu.memory_space<vmem>>, %arg9: memref<1x32xf32, #tpu.memory_space<vmem>>, %arg10: memref<1xf32, #tpu.memory_space<smem>>, %arg11: memref<1x256x32xf32, #tpu.memory_space<vmem>>, %arg12: memref<256x128xbf16, #tpu.memory_space<vmem>>, %arg13: memref<256x32xbf16, #tpu.memory_space<vmem>>) attributes {dimension_semantics = [#tpu.dimension_semantics<parallel>, #tpu.dimension_semantics<arbitrary>], iteration_bounds = array<i64: 2, 1>, scalar_prefetch = 0 : i64, scratch_operands = 2 : i64, tpu.core_type = #tpu.core_type<tc>, window_params = [{transform_indices = @transform_0, window_bounds = array<i64: 1, 256, 32>}, {transform_indices = @transform_1, window_bounds = array<i64: 1, 256, 32>}, {pipeline_mode = #tpu.pipeline_mode<synchronous>, transform_indices = @transform_2, window_bounds = array<i64: 32, 128>}, {pipeline_mode = #tpu.pipeline_mode<synchronous>, transform_indices = @transform_3, window_bounds = array<i64: 1, 128>}, {pipeline_mode = #tpu.pipeline_mode<synchronous>, transform_indices = @transform_4, window_bounds = array<i64: 32, 128>}, {pipeline_mode = #tpu.pipeline_mode<synchronous>, transform_indices = @transform_5, window_bounds = array<i64: 1, 128>}, {pipeline_mode = #tpu.pipeline_mode<synchronous>, transform_indices = @transform_6, window_bounds = array<i64: 32, 32>}, {pipeline_mode = #tpu.pipeline_mode<synchronous>, transform_indices = @transform_7, window_bounds = array<i64: 1, 32>}, {transform_indices = @transform_8, window_bounds = array<i64: 1>}, {transform_indices = @transform_9, window_bounds = array<i64: 1, 256, 32>}]} {
    %c0_i32 = arith.constant 0 : i32
    %0 = arith.cmpi eq, %arg1, %c0_i32 : i32
    %1 = arith.extui %0 : i1 to i32
    %c0_i32_0 = arith.constant 0 : i32
    %2 = arith.cmpi ne, %1, %c0_i32_0 : i32
    scf.if %2 {
      %c0_19 = arith.constant 0 : index
      %c0_20 = arith.constant 0 : index
      %c0_21 = arith.constant 0 : index
      %34 = vector.load %arg3[%c0_19, %c0_20, %c0_21] : memref<1x256x32xf32, #tpu.memory_space<vmem>>, vector<1x256x32xf32>
      %35 = vector.shape_cast %34 : vector<1x256x32xf32> to vector<256x32xf32>
      %36 = arith.truncf %35 : vector<256x32xf32> to vector<256x32xbf16>
      %c0_22 = arith.constant 0 : index
      %c0_23 = arith.constant 0 : index
      %37 = vector.load %arg6[%c0_22, %c0_23] : memref<32x128xbf16, #tpu.memory_space<vmem>>, vector<32x128xbf16>
      %cst_24 = arith.constant dense<0.000000e+00> : vector<256x128xf32>
      %38 = tpu.matmul %36, %37, %cst_24 {dimension_numbers = #tpu.dot_dimension_numbers<[1], [0], [0], [1], [0, 0, 1, 1], [], []>} : vector<256x32xbf16>, vector<32x128xbf16>, vector<256x128xf32> -> vector<256x128xf32>
      %c0_25 = arith.constant 0 : index
      %c0_26 = arith.constant 0 : index
      %39 = vector.load %arg7[%c0_25, %c0_26] : memref<1x128xf32, #tpu.memory_space<vmem>>, vector<1x128xf32>
      %40 = vector.broadcast %39 : vector<1x128xf32> to vector<256x128xf32>
      %41 = arith.addf %38, %40 : vector<256x128xf32>
      %c0_27 = arith.constant 0 : index
      %c0_28 = arith.constant 0 : index
      %42 = vector.load %arg8[%c0_27, %c0_28] : memref<32x32xbf16, #tpu.memory_space<vmem>>, vector<32x32xbf16>
      %cst_29 = arith.constant dense<0.000000e+00> : vector<256x32xf32>
      %43 = tpu.matmul %36, %42, %cst_29 {dimension_numbers = #tpu.dot_dimension_numbers<[1], [0], [0], [1], [0, 0, 1, 1], [], []>} : vector<256x32xbf16>, vector<32x32xbf16>, vector<256x32xf32> -> vector<256x32xf32>
      %c0_30 = arith.constant 0 : index
      %c0_31 = arith.constant 0 : index
      %44 = vector.load %arg9[%c0_30, %c0_31] : memref<1x32xf32, #tpu.memory_space<vmem>>, vector<1x32xf32>
      %45 = vector.broadcast %44 : vector<1x32xf32> to vector<256x32xf32>
      %46 = arith.addf %43, %45 : vector<256x32xf32>
      %47 = arith.truncf %41 : vector<256x128xf32> to vector<256x128xbf16>
      %c0_32 = arith.constant 0 : index
      %c0_33 = arith.constant 0 : index
      %48 = vector.load %arg12[%c0_32, %c0_33] : memref<256x128xbf16, #tpu.memory_space<vmem>>, vector<256x128xbf16>
      tpu.vector_store %arg12[%c0_32, %c0_33], %47 {strides = array<i32>} : memref<256x128xbf16, #tpu.memory_space<vmem>>, vector<256x128xbf16>,
      %49 = arith.truncf %46 : vector<256x32xf32> to vector<256x32xbf16>
      %c0_34 = arith.constant 0 : index
      %c0_35 = arith.constant 0 : index
      %50 = vector.load %arg13[%c0_34, %c0_35] : memref<256x32xbf16, #tpu.memory_space<vmem>>, vector<256x32xbf16>
      tpu.vector_store %arg13[%c0_34, %c0_35], %49 {strides = array<i32>} : memref<256x32xbf16, #tpu.memory_space<vmem>>, vector<256x32xbf16>,
    } else {
    }
    %c0 = arith.constant 0 : index
    %c0_1 = arith.constant 0 : index
    %c0_2 = arith.constant 0 : index
    %3 = vector.load %arg2[%c0, %c0_1, %c0_2] : memref<1x256x32xf32, #tpu.memory_space<vmem>>, vector<1x256x32xf32>
    %4 = vector.shape_cast %3 : vector<1x256x32xf32> to vector<256x32xf32>
    %5 = arith.truncf %4 : vector<256x32xf32> to vector<256x32xbf16>
    %c0_3 = arith.constant 0 : index
    %c0_4 = arith.constant 0 : index
    %6 = vector.load %arg4[%c0_3, %c0_4] : memref<32x128xbf16, #tpu.memory_space<vmem>>, vector<32x128xbf16>
    %cst = arith.constant dense<0.000000e+00> : vector<256x128xf32>
    %7 = tpu.matmul %5, %6, %cst {dimension_numbers = #tpu.dot_dimension_numbers<[1], [0], [0], [1], [0, 0, 1, 1], [], []>} : vector<256x32xbf16>, vector<32x128xbf16>, vector<256x128xf32> -> vector<256x128xf32>
    %c0_5 = arith.constant 0 : index
    %c0_6 = arith.constant 0 : index
    %8 = vector.load %arg5[%c0_5, %c0_6] : memref<1x128xf32, #tpu.memory_space<vmem>>, vector<1x128xf32>
    %9 = vector.broadcast %8 : vector<1x128xf32> to vector<256x128xf32>
    %10 = arith.addf %7, %9 : vector<256x128xf32>
    %11 = arith.truncf %10 : vector<256x128xf32> to vector<256x128xbf16>
    %c0_7 = arith.constant 0 : index
    %c0_8 = arith.constant 0 : index
    %12 = vector.load %arg12[%c0_7, %c0_8] : memref<256x128xbf16, #tpu.memory_space<vmem>>, vector<256x128xbf16>
    %cst_9 = arith.constant dense<0.000000e+00> : vector<256x256xf32>
    %13 = tpu.matmul %11, %12, %cst_9 {dimension_numbers = #tpu.dot_dimension_numbers<[1], [1], [0], [0], [0, 0, 1, 0], [], []>} : vector<256x128xbf16>, vector<256x128xbf16>, vector<256x256xf32> -> vector<256x256xf32>
    %cst_10 = arith.constant dense<0xFF800000> : vector<256xf32>
    %14 = vector.multi_reduction <maximumf>, %13, %cst_10 [1] : vector<256x256xf32> to vector<256xf32>
    %15 = vector.shape_cast %14 : vector<256xf32> to vector<256x1xf32>
    %16 = vector.broadcast %15 : vector<256x1xf32> to vector<256x256xf32>
    %17 = arith.subf %13, %16 : vector<256x256xf32>
    %18 = math.exp %17 : vector<256x256xf32>
    %cst_11 = arith.constant dense<0.000000e+00> : vector<256xf32>
    %19 = vector.multi_reduction <add>, %18, %cst_11 [1] : vector<256x256xf32> to vector<256xf32>
    %20 = vector.shape_cast %19 : vector<256xf32> to vector<256x1xf32>
    %21 = arith.truncf %18 : vector<256x256xf32> to vector<256x256xbf16>
    %c0_12 = arith.constant 0 : index
    %c0_13 = arith.constant 0 : index
    %22 = vector.load %arg13[%c0_12, %c0_13] : memref<256x32xbf16, #tpu.memory_space<vmem>>, vector<256x32xbf16>
    %cst_14 = arith.constant dense<0.000000e+00> : vector<256x32xf32>
    %23 = tpu.matmul %21, %22, %cst_14 {dimension_numbers = #tpu.dot_dimension_numbers<[1], [0], [0], [1], [0, 0, 1, 1], [], []>} : vector<256x256xbf16>, vector<256x32xbf16>, vector<256x32xf32> -> vector<256x32xf32>
    %24 = tpu.reciprocal %20 {approx = true} : vector<256x1xf32> -> vector<256x1xf32>
    %25 = vector.broadcast %24 : vector<256x1xf32> to vector<256x32xf32>
    %26 = arith.mulf %23, %25 : vector<256x32xf32>
    %c0_15 = arith.constant 0 : index
    %27 = memref.load %arg10[%c0_15] : memref<1xf32, #tpu.memory_space<smem>>
    %28 = vector.broadcast %27 : f32 to vector<256x32xf32>
    %29 = arith.mulf %28, %26 : vector<256x32xf32>
    %30 = arith.addf %29, %4 : vector<256x32xf32>
    %c0_16 = arith.constant 0 : index
    %c0_17 = arith.constant 0 : index
    %c0_18 = arith.constant 0 : index
    %31 = vector.load %arg11[%c0_16, %c0_17, %c0_18] : memref<1x256x32xf32, #tpu.memory_space<vmem>>, vector<1x256x32xf32>
    %32 = vector.shape_cast %31 : vector<1x256x32xf32> to vector<256x32xf32>
    %33 = vector.shape_cast %30 : vector<256x32xf32> to vector<1x256x32xf32>
    tpu.vector_store %arg11[%c0_16, %c0_17, %c0_18], %33 {strides = array<i32>} : memref<1x256x32xf32, #tpu.memory_space<vmem>>, vector<1x256x32xf32>,
    return
  }
  func.func @transform_0(%arg0: i32, %arg1: i32) -> (i32, i32, i32) {
    %c0_i32 = arith.constant 0 : i32
    %c0_i32_0 = arith.constant 0 : i32
    return %arg0, %arg1, %c0_i32 : i32, i32, i32
  }
  func.func @transform_1(%arg0: i32, %arg1: i32) -> (i32, i32, i32) {
    %c0_i32 = arith.constant 0 : i32
    %c0_i32_0 = arith.constant 0 : i32
    %c0_i32_1 = arith.constant 0 : i32
    return %arg0, %c0_i32, %c0_i32_0 : i32, i32, i32
  }
  func.func @transform_2(%arg0: i32, %arg1: i32) -> (i32, i32) {
    %c0_i32 = arith.constant 0 : i32
    %c0_i32_0 = arith.constant 0 : i32
    %c0_i32_1 = arith.constant 0 : i32
    return %c0_i32, %c0_i32_0 : i32, i32
  }
  func.func @transform_3(%arg0: i32, %arg1: i32) -> (i32, i32) {
    %c0_i32 = arith.constant 0 : i32
    %c0_i32_0 = arith.constant 0 : i32
    %c0_i32_1 = arith.constant 0 : i32
    return %c0_i32, %c0_i32_0 : i32, i32
  }
  func.func @transform_4(%arg0: i32, %arg1: i32) -> (i32, i32) {
    %c0_i32 = arith.constant 0 : i32
    %c0_i32_0 = arith.constant 0 : i32
    %c0_i32_1 = arith.constant 0 : i32
    return %c0_i32, %c0_i32_0 : i32, i32
  }
  func.func @transform_5(%arg0: i32, %arg1: i32) -> (i32, i32) {
    %c0_i32 = arith.constant 0 : i32
    %c0_i32_0 = arith.constant 0 : i32
    %c0_i32_1 = arith.constant 0 : i32
    return %c0_i32, %c0_i32_0 : i32, i32
  }
  func.func @transform_6(%arg0: i32, %arg1: i32) -> (i32, i32) {
    %c0_i32 = arith.constant 0 : i32
    %c0_i32_0 = arith.constant 0 : i32
    %c0_i32_1 = arith.constant 0 : i32
    return %c0_i32, %c0_i32_0 : i32, i32
  }
  func.func @transform_7(%arg0: i32, %arg1: i32) -> (i32, i32) {
    %c0_i32 = arith.constant 0 : i32
    %c0_i32_0 = arith.constant 0 : i32
    %c0_i32_1 = arith.constant 0 : i32
    return %c0_i32, %c0_i32_0 : i32, i32
  }
  func.func @transform_8(%arg0: i32, %arg1: i32) -> i32 {
    %c0_i32 = arith.constant 0 : i32
    %c0_i32_0 = arith.constant 0 : i32
    return %c0_i32 : i32
  }
  func.func @transform_9(%arg0: i32, %arg1: i32) -> (i32, i32, i32) {
    %c0_i32 = arith.constant 0 : i32
    %c0_i32_0 = arith.constant 0 : i32
    return %arg0, %arg1, %c0_i32 : i32, i32, i32
  }
}

</mosaic_0001>

<llo_original>
// kernel: tpu_custom_call.1
$region0: #{tpu_custom_call.1}
  #allocation0 [shape = 'u32[]', space=smem, size = 0x4, offset = 0x4, fixed_abs, tag = 'smem constant byte address 0x4 - core index']
  #allocation1 [shape = 'u32[144,128]{1,0:T(1,128)}', space=vmem, size = 0x12000, scoped, tag = 'internal scratch']
  #allocation2 [shape = 'bf16[256,128]{1,0:T(16,128)(2,1)}', space=vmem, size = 0x10000, scoped, tag = 'scratch operand']
  #allocation3 [shape = 'bf16[256,32]{1,0:T(16,128)(2,1)}', space=vmem, size = 0x10000, scoped, tag = 'scratch operand']
  #allocation4 [shape = 'f32[1]{0:T(128)S(6)}', space=smem, size = 0x200, scoped, tag = 'scoped memory for tpu_custom_call.1']
  %s0 = inlined_call_operand.vmem [shape: f32[2,256,32], index: 0, kind: input, shape index: {}]
  %s1 = inlined_call_operand.vmem [shape: f32[2,256,32], index: 1, kind: input, shape index: {}]
  %s2 = inlined_call_operand.vmem [shape: bf16[32,128], index: 2, kind: input, shape index: {}]
  %s3 = inlined_call_operand.vmem [shape: f32[1,128], index: 3, kind: input, shape index: {}]
  %s4 = inlined_call_operand.vmem [shape: bf16[32,128], index: 4, kind: input, shape index: {}]
  %s5 = inlined_call_operand.vmem [shape: f32[1,128], index: 5, kind: input, shape index: {}]
  %s6 = inlined_call_operand.vmem [shape: bf16[32,32], index: 6, kind: input, shape index: {}]
  %s7 = inlined_call_operand.vmem [shape: f32[1,32], index: 7, kind: input, shape index: {}]
  %s8 = inlined_call_operand.<no memory space> [shape: f32[1], index: 8, kind: input, shape index: {}]
  %s9 = inlined_call_operand.vmem [shape: f32[2,256,32], index: 9, kind: output, shape index: {}]
  %s10 = sld [smem:[#allocation0]]
  $region73: #{tpu_custom_call.1} parent=0
    _
  %s12 = ssub.s32 1, %s10
  %s13 = scalar_select 0, %s12, %s10
  %14 = sst [smem:[#allocation4]] %s8
  loop: start=0, step=1, limit=4
  $region2: #{tpu_custom_call.1} parent=0 // loop_pre_header
    _
  $region3: #{tpu_custom_call.1} parent=0 // loop_header
    %s16 = sphi 0, %s20
    %p17 = scmp.ge.s32.totalorder %s16, 4
    %s23 = sphi 0, %s35
    %s24 = sphi 0, %s31
    %s25 = sphi 0, %s23
    %s26 = sphi 0, %s24
    %s27 = sphi 0, %s25
    %s28 = sphi 0, %s26
    %s40 = sphi 0, %s42
    %s43 = sphi 0, %s40
    %s44 = sphi 0, %s43
    %s60 = sphi 0, %s44
    %s66 = sphi 0, %s68
    %s69 = sphi 0, %s66
    %s70 = sphi 0, %s69
    %s86 = sphi 0, %s70
    %s90 = sphi 0, %s90
    %s92 = sphi 0, %s90
    %s93 = sphi 0, %s92
    %s107 = sphi 0, %s93
    %s111 = sphi 0, %s111
    %s113 = sphi 0, %s111
    %s114 = sphi 0, %s113
    %s128 = sphi 0, %s114
    %s132 = sphi 0, %s132
    %s134 = sphi 0, %s132
    %s135 = sphi 0, %s134
    %s149 = sphi 0, %s135
    %s153 = sphi 0, %s153
    %s155 = sphi 0, %s153
    %s156 = sphi 0, %s155
    %s170 = sphi 0, %s156
    %s174 = sphi 0, %s174
    %s176 = sphi 0, %s174
    %s177 = sphi 0, %s176
    %s191 = sphi 0, %s177
    %s195 = sphi 0, %s195
    %s197 = sphi 0, %s195
    %s198 = sphi 0, %s197
    %s212 = sphi 0, %s198
    %s216 = sphi 0, %s216
    %s218 = sphi 0, %s216
    %s219 = sphi 0, %s218
    %s233 = sphi 0, %s219
    %s241 = sphi 0, %s243
    %s244 = sphi 0, %s241
    %s245 = sphi 0, %s244
    %s261 = sphi 0, %s245
  $region4: #{tpu_custom_call.1} parent=0 // loop_header_branch
    %19 = sbr.rel (%p17) target = $region8
  $region5: #{tpu_custom_call.1} parent=0 // loop_body
    %s21 = ssub.s32 %s16, 1
    %s22 = ssub.s32 %s16, 2
    %s29 = sadd.s32 1, %s24
    %p30 = scmp.ge.s32.totalorder %s29, 1
    %s31 = scalar_select %p30, 0, %s29
    %s32 = sadd.s32 1, %s23
    %s33 = scalar_select %p30, %s32, %s23
    %p34 = scmp.ge.s32.totalorder %s33, 2
    %s35 = scalar_select %p34, 0, %s33
    %s36 = ssub.s32 %s23, %s35
    %s37 = ssub.s32 %s24, %s31
    %s38 = sor.u32 %s36, %s37
    %p39 = scmp.eq.s32.totalorder %s38, 0
    %s41 = sadd.s32 %s40, 1
    %s42 = scalar_select %p39, %s40, %s41
    %p45 = pneg %p39
    %p46 = scmp.eq.s32.totalorder %s16, 1
    %p47 = por %p45, %p46
    %p48 = scmp.ne.s32.totalorder %s40, %s43
    %p49 = scmp.eq.s32.totalorder %s16, 0
    %p50 = por %p48, %p49
    %p51 = scmp.ne.s32.totalorder %s40, %s43
    %p52 = scmp.eq.s32.totalorder %s21, 1
    %p53 = por %p51, %p52
    %p54 = scmp.ne.s32.totalorder %s43, %s44
    %p55 = scmp.eq.s32.totalorder %s21, 0
    %p56 = por %p54, %p55
    %p57 = scmp.ne.s32.totalorder %s43, %s44
    %p58 = scmp.eq.s32.totalorder %s22, 1
    %p59 = por %p57, %p58
    %p61 = scmp.ne.s32.totalorder %s44, %s60
    %p62 = scmp.eq.s32.totalorder %s22, 0
    %p63 = por %p61, %p62
    %s64 = ssub.s32 %s23, %s35
    %p65 = scmp.eq.s32.totalorder %s64, 0
    %s67 = sadd.s32 %s66, 1
    %s68 = scalar_select %p65, %s66, %s67
    %p71 = pneg %p65
    %p72 = scmp.eq.s32.totalorder %s16, 1
    %p73 = por %p71, %p72
    %p74 = scmp.ne.s32.totalorder %s66, %s69
    %p75 = scmp.eq.s32.totalorder %s16, 0
    %p76 = por %p74, %p75
    %p77 = scmp.ne.s32.totalorder %s66, %s69
    %p78 = scmp.eq.s32.totalorder %s21, 1
    %p79 = por %p77, %p78
    %p80 = scmp.ne.s32.totalorder %s69, %s70
    %p81 = scmp.eq.s32.totalorder %s21, 0
    %p82 = por %p80, %p81
    %p83 = scmp.ne.s32.totalorder %s69, %s70
    %p84 = scmp.eq.s32.totalorder %s22, 1
    %p85 = por %p83, %p84
    %p87 = scmp.ne.s32.totalorder %s70, %s86
    %p88 = scmp.eq.s32.totalorder %s22, 0
    %p89 = por %p87, %p88
    %s91 = sadd.s32 %s90, 1
    %p94 = scmp.eq.s32.totalorder %s16, 1
    %p95 = scmp.ne.s32.totalorder %s90, %s92
    %p96 = scmp.eq.s32.totalorder %s16, 0
    %p97 = por %p95, %p96
    %p98 = scmp.ne.s32.totalorder %s90, %s92
    %p99 = scmp.eq.s32.totalorder %s21, 1
    %p100 = por %p98, %p99
    %p101 = scmp.ne.s32.totalorder %s92, %s93
    %p102 = scmp.eq.s32.totalorder %s21, 0
    %p103 = por %p101, %p102
    %p104 = scmp.ne.s32.totalorder %s92, %s93
    %p105 = scmp.eq.s32.totalorder %s22, 1
    %p106 = por %p104, %p105
    %p108 = scmp.ne.s32.totalorder %s93, %s107
    %p109 = scmp.eq.s32.totalorder %s22, 0
    %p110 = por %p108, %p109
    %s112 = sadd.s32 %s111, 1
    %p115 = scmp.eq.s32.totalorder %s16, 1
    %p116 = scmp.ne.s32.totalorder %s111, %s113
    %p117 = scmp.eq.s32.totalorder %s16, 0
    %p118 = por %p116, %p117
    %p119 = scmp.ne.s32.totalorder %s111, %s113
    %p120 = scmp.eq.s32.totalorder %s21, 1
    %p121 = por %p119, %p120
    %p122 = scmp.ne.s32.totalorder %s113, %s114
    %p123 = scmp.eq.s32.totalorder %s21, 0
    %p124 = por %p122, %p123
    %p125 = scmp.ne.s32.totalorder %s113, %s114
    %p126 = scmp.eq.s32.totalorder %s22, 1
    %p127 = por %p125, %p126
    %p129 = scmp.ne.s32.totalorder %s114, %s128
    %p130 = scmp.eq.s32.totalorder %s22, 0
    %p131 = por %p129, %p130
    %s133 = sadd.s32 %s132, 1
    %p136 = scmp.eq.s32.totalorder %s16, 1
    %p137 = scmp.ne.s32.totalorder %s132, %s134
    %p138 = scmp.eq.s32.totalorder %s16, 0
    %p139 = por %p137, %p138
    %p140 = scmp.ne.s32.totalorder %s132, %s134
    %p141 = scmp.eq.s32.totalorder %s21, 1
    %p142 = por %p140, %p141
    %p143 = scmp.ne.s32.totalorder %s134, %s135
    %p144 = scmp.eq.s32.totalorder %s21, 0
    %p145 = por %p143, %p144
    %p146 = scmp.ne.s32.totalorder %s134, %s135
    %p147 = scmp.eq.s32.totalorder %s22, 1
    %p148 = por %p146, %p147
    %p150 = scmp.ne.s32.totalorder %s135, %s149
    %p151 = scmp.eq.s32.totalorder %s22, 0
    %p152 = por %p150, %p151
    %s154 = sadd.s32 %s153, 1
    %p157 = scmp.eq.s32.totalorder %s16, 1
    %p158 = scmp.ne.s32.totalorder %s153, %s155
    %p159 = scmp.eq.s32.totalorder %s16, 0
    %p160 = por %p158, %p159
    %p161 = scmp.ne.s32.totalorder %s153, %s155
    %p162 = scmp.eq.s32.totalorder %s21, 1
    %p163 = por %p161, %p162
    %p164 = scmp.ne.s32.totalorder %s155, %s156
    %p165 = scmp.eq.s32.totalorder %s21, 0
    %p166 = por %p164, %p165
    %p167 = scmp.ne.s32.totalorder %s155, %s156
    %p168 = scmp.eq.s32.totalorder %s22, 1
    %p169 = por %p167, %p168
    %p171 = scmp.ne.s32.totalorder %s156, %s170
    %p172 = scmp.eq.s32.totalorder %s22, 0
    %p173 = por %p171, %p172
    %s175 = sadd.s32 %s174, 1
    %p178 = scmp.eq.s32.totalorder %s16, 1
    %p179 = scmp.ne.s32.totalorder %s174, %s176
    %p180 = scmp.eq.s32.totalorder %s16, 0
    %p181 = por %p179, %p180
    %p182 = scmp.ne.s32.totalorder %s174, %s176
    %p183 = scmp.eq.s32.totalorder %s21, 1
    %p184 = por %p182, %p183
    %p185 = scmp.ne.s32.totalorder %s176, %s177
    %p186 = scmp.eq.s32.totalorder %s21, 0
    %p187 = por %p185, %p186
    %p188 = scmp.ne.s32.totalorder %s176, %s177
    %p189 = scmp.eq.s32.totalorder %s22, 1
    %p190 = por %p188, %p189
    %p192 = scmp.ne.s32.totalorder %s177, %s191
    %p193 = scmp.eq.s32.totalorder %s22, 0
    %p194 = por %p192, %p193
    %s196 = sadd.s32 %s195, 1
    %p199 = scmp.eq.s32.totalorder %s16, 1
    %p200 = scmp.ne.s32.totalorder %s195, %s197
    %p201 = scmp.eq.s32.totalorder %s16, 0
    %p202 = por %p200, %p201
    %p203 = scmp.ne.s32.totalorder %s195, %s197
    %p204 = scmp.eq.s32.totalorder %s21, 1
    %p205 = por %p203, %p204
    %p206 = scmp.ne.s32.totalorder %s197, %s198
    %p207 = scmp.eq.s32.totalorder %s21, 0
    %p208 = por %p206, %p207
    %p209 = scmp.ne.s32.totalorder %s197, %s198
    %p210 = scmp.eq.s32.totalorder %s22, 1
    %p211 = por %p209, %p210
    %p213 = scmp.ne.s32.totalorder %s198, %s212
    %p214 = scmp.eq.s32.totalorder %s22, 0
    %p215 = por %p213, %p214
    %s217 = sadd.s32 %s216, 1
    %p220 = scmp.eq.s32.totalorder %s16, 1
    %p221 = scmp.ne.s32.totalorder %s216, %s218
    %p222 = scmp.eq.s32.totalorder %s16, 0
    %p223 = por %p221, %p222
    %p224 = scmp.ne.s32.totalorder %s216, %s218
    %p225 = scmp.eq.s32.totalorder %s21, 1
    %p226 = por %p224, %p225
    %p227 = scmp.ne.s32.totalorder %s218, %s219
    %p228 = scmp.eq.s32.totalorder %s21, 0
    %p229 = por %p227, %p228
    %p230 = scmp.ne.s32.totalorder %s218, %s219
    %p231 = scmp.eq.s32.totalorder %s22, 1
    %p232 = por %p230, %p231
    %p234 = scmp.ne.s32.totalorder %s219, %s233
    %p235 = scmp.eq.s32.totalorder %s22, 0
    %p236 = por %p234, %p235
    %s237 = ssub.s32 %s23, %s35
    %s238 = ssub.s32 %s24, %s31
    %s239 = sor.u32 %s237, %s238
    %p240 = scmp.eq.s32.totalorder %s239, 0
    %s242 = sadd.s32 %s241, 1
    %s243 = scalar_select %p240, %s241, %s242
    %p246 = pneg %p240
    %p247 = scmp.eq.s32.totalorder %s16, 1
    %p248 = por %p246, %p247
    %p249 = scmp.ne.s32.totalorder %s241, %s244
    %p250 = scmp.eq.s32.totalorder %s16, 0
    %p251 = por %p249, %p250
    %p252 = scmp.ne.s32.totalorder %s241, %s244
    %p253 = scmp.eq.s32.totalorder %s21, 1
    %p254 = por %p252, %p253
    %p255 = scmp.ne.s32.totalorder %s244, %s245
    %p256 = scmp.eq.s32.totalorder %s21, 0
    %p257 = por %p255, %p256
    %p258 = scmp.ne.s32.totalorder %s244, %s245
    %p259 = scmp.eq.s32.totalorder %s22, 1
    %p260 = por %p258, %p259
    %p262 = scmp.ne.s32.totalorder %s245, %s261
    %p263 = scmp.eq.s32.totalorder %s22, 0
    %p264 = por %p262, %p263
    %p265 = scmp.le.s32.totalorder 1, %s16
    %p266 = scmp.lt.s32.totalorder %s16, 3
    %p267 = pnand %p265, %p266
    %p268 = pneg %p267
    // Predicated region
    $region9: #{tpu_custom_call.1} parent=5 // pred_check
      _
    $region10: #{tpu_custom_call.1} parent=5 // pred_check_branch
      %270 = sbr.rel (%p267) target = $region12
    $region11: #{tpu_custom_call.1} parent=5 // pred_region
      %s271 = ssub.s32 %s16, 1
      // Predicated region
      $region13: #{tpu_custom_call.1} parent=11 // pred_check
        %p272 = pneg %p103
      $region14: #{tpu_custom_call.1} parent=11 // pred_check_branch
        %274 = sbr.rel (%p272) target = $region16
      $region15: #{tpu_custom_call.1} parent=11 // pred_region
        _
      $region16: #{tpu_custom_call.1} parent=11 // pred_fallthru
        _
      // Predicated region
      $region17: #{tpu_custom_call.1} parent=11 // pred_check
        %p275 = pneg %p124
      $region18: #{tpu_custom_call.1} parent=11 // pred_check_branch
        %277 = sbr.rel (%p275) target = $region20
      $region19: #{tpu_custom_call.1} parent=11 // pred_region
        _
      $region20: #{tpu_custom_call.1} parent=11 // pred_fallthru
        _
      // Predicated region
      $region21: #{tpu_custom_call.1} parent=11 // pred_check
        %p278 = pneg %p145
      $region22: #{tpu_custom_call.1} parent=11 // pred_check_branch
        %280 = sbr.rel (%p278) target = $region24
      $region23: #{tpu_custom_call.1} parent=11 // pred_region
        _
      $region24: #{tpu_custom_call.1} parent=11 // pred_fallthru
        _
      // Predicated region
      $region25: #{tpu_custom_call.1} parent=11 // pred_check
        %p281 = pneg %p166
      $region26: #{tpu_custom_call.1} parent=11 // pred_check_branch
        %283 = sbr.rel (%p281) target = $region28
      $region27: #{tpu_custom_call.1} parent=11 // pred_region
        _
      $region28: #{tpu_custom_call.1} parent=11 // pred_fallthru
        _
      // Predicated region
      $region29: #{tpu_custom_call.1} parent=11 // pred_check
        %p284 = pneg %p187
      $region30: #{tpu_custom_call.1} parent=11 // pred_check_branch
        %286 = sbr.rel (%p284) target = $region32
      $region31: #{tpu_custom_call.1} parent=11 // pred_region
        _
      $region32: #{tpu_custom_call.1} parent=11 // pred_fallthru
        _
      // Predicated region
      $region33: #{tpu_custom_call.1} parent=11 // pred_check
        %p287 = pneg %p208
      $region34: #{tpu_custom_call.1} parent=11 // pred_check_branch
        %289 = sbr.rel (%p287) target = $region36
      $region35: #{tpu_custom_call.1} parent=11 // pred_region
        _
      $region36: #{tpu_custom_call.1} parent=11 // pred_fallthru
        _
      // Predicated region
      $region37: #{tpu_custom_call.1} parent=11 // pred_check
        %p290 = pneg %p229
      $region38: #{tpu_custom_call.1} parent=11 // pred_check_branch
        %292 = sbr.rel (%p290) target = $region40
      $region39: #{tpu_custom_call.1} parent=11 // pred_region
        _
      $region40: #{tpu_custom_call.1} parent=11 // pred_fallthru
        _
    $region12: #{tpu_custom_call.1} parent=5 // pred_fallthru
      _
    %p293 = scmp.lt.s32.totalorder %s16, 2
    // Predicated region
    $region41: #{tpu_custom_call.1} parent=5 // pred_check
      %p294 = pneg %p293
    $region42: #{tpu_custom_call.1} parent=5 // pred_check_branch
      %296 = sbr.rel (%p294) target = $region44
    $region43: #{tpu_custom_call.1} parent=5 // pred_region
      // Predicated region
      $region45: #{tpu_custom_call.1} parent=43 // pred_check
        %p297 = pneg %p50
      $region46: #{tpu_custom_call.1} parent=43 // pred_check_branch
        %299 = sbr.rel (%p297) target = $region48
      $region47: #{tpu_custom_call.1} parent=43 // pred_region
        %s300 = smul.u32 32, %s24
        %p301 = scmp.lt.s32.totalorder %s23, 1
        %s302 = scalar_select %p301, %s23, 1
        %p303 = scmp.lt.s32.totalorder %s300, 31
        %s304 = scalar_select %p303, %s300, 31
        %s305 = smul.addr %s302, 32
        %s306 = sadd.s32 %s304, %s305
        %s307 = smul.addr %s306, 8
        %s308 = scalar_lea.vmem %s0, %s307
        %s309 = smul.u32 32, %s24
      $region48: #{tpu_custom_call.1} parent=43 // pred_fallthru
        _
      // Predicated region
      $region49: #{tpu_custom_call.1} parent=43 // pred_check
        %p310 = pneg %p76
      $region50: #{tpu_custom_call.1} parent=43 // pred_check_branch
        %312 = sbr.rel (%p310) target = $region52
      $region51: #{tpu_custom_call.1} parent=43 // pred_region
        %p313 = scmp.lt.s32.totalorder %s23, 1
        %s314 = scalar_select %p313, %s23, 1
        %s315 = smul.addr %s314, 32
        %s316 = smul.addr %s315, 8
        %s317 = scalar_lea.vmem %s1, %s316
      $region52: #{tpu_custom_call.1} parent=43 // pred_fallthru
        _
    $region44: #{tpu_custom_call.1} parent=5 // pred_fallthru
      _
    %p318 = scmp.le.s32.totalorder 1, %s16
    %p319 = scmp.lt.s32.totalorder %s16, 3
    %p320 = pnand %p318, %p319
    %p321 = pneg %p320
    // Predicated region
    $region53: #{tpu_custom_call.1} parent=5 // pred_check
      _
    $region54: #{tpu_custom_call.1} parent=5 // pred_check_branch
      %323 = sbr.rel (%p320) target = $region56
    $region55: #{tpu_custom_call.1} parent=5 // pred_region
      %s324 = ssub.s32 %s16, 1
      %s325 = smul.u32 32, %s26
      %p326 = scmp.lt.s32.totalorder %s25, 1
      %s327 = scalar_select %p326, %s25, 1
      %p328 = scmp.lt.s32.totalorder %s325, 31
      %s329 = scalar_select %p328, %s325, 31
      %s330 = smul.addr %s327, 32
      %s331 = sadd.s32 %s329, %s330
      %s332 = smul.addr %s331, 8
      %s333 = scalar_lea.vmem %s0, %s332
      %p334 = pneg %p56
      %p335 = pneg %p53
      %p336 = scmp.lt.s32.totalorder %s25, 1
      %s337 = scalar_select %p336, %s25, 1
      %s338 = smul.addr %s337, 32
      %s339 = smul.addr %s338, 8
      %s340 = scalar_lea.vmem %s1, %s339
      %p341 = pneg %p82
      %p342 = pneg %p79
      %p343 = pneg %p103
      %p344 = pneg %p100
      %p345 = pneg %p124
      %p346 = pneg %p121
      %p347 = pneg %p145
      %p348 = pneg %p142
      %p349 = pneg %p166
      %p350 = pneg %p163
      %p351 = pneg %p187
      %p352 = pneg %p184
      %p353 = pneg %p208
      %p354 = pneg %p205
      %p355 = pneg %p229
      %p356 = pneg %p226
      %p357 = pneg %p257
      %p358 = pneg %p254
      %s359 = smul.u32 32, %s26
      %p360 = scmp.lt.s32.totalorder %s25, 1
      %s361 = scalar_select %p360, %s25, 1
      %p362 = scmp.lt.s32.totalorder %s359, 31
      %s363 = scalar_select %p362, %s359, 31
      %s364 = smul.addr %s361, 32
      %s365 = sadd.s32 %s363, %s364
      %s366 = smul.addr %s365, 8
      %s367 = scalar_lea.vmem %s9, %s366
      %s368 = smul.u32 32, %s26
      %p369 = scmp.lt.s32.totalorder %s25, 1
      %s370 = scalar_select %p369, %s25, 1
      %p371 = scmp.lt.s32.totalorder %s368, 31
      %s372 = scalar_select %p371, %s368, 31
      %s373 = smul.addr %s370, 32
      %s374 = sadd.s32 %s372, %s373
      %s375 = smul.addr %s374, 8
      %s376 = scalar_lea.vmem %s0, %s375
      %s377 = smul.u32 32, %s26
      %p378 = scmp.lt.s32.totalorder %s25, 1
      %s379 = scalar_select %p378, %s25, 1
      %s380 = smul.addr %s379, 32
      %s381 = smul.addr %s380, 8
      %s382 = scalar_lea.vmem %s1, %s381
      %s383 = smul.u32 32, %s26
      %p384 = scmp.lt.s32.totalorder %s25, 1
      %s385 = scalar_select %p384, %s25, 1
      %p386 = scmp.lt.s32.totalorder %s383, 31
      %s387 = scalar_select %p386, %s383, 31
      %s388 = smul.addr %s385, 32
      %s389 = sadd.s32 %s387, %s388
      %s390 = smul.addr %s389, 8
      %s391 = scalar_lea.vmem %s9, %s390
      %s392 = smul.u32 32, %s26
      %p394 = scmp.eq.s32.totalorder %s26, 0
      // Predicated region
      $region57: #{tpu_custom_call.1} parent=55 // pred_check
        %p395 = pneg %p394
      $region58: #{tpu_custom_call.1} parent=55 // pred_check_branch
        %397 = sbr.rel (%p395) target = $region60
      $region59: #{tpu_custom_call.1} parent=55 // pred_region
        %v398 = vld [vmem:[%s382] sm:$0xff]
        %v399 = vld [vmem:[%s382 + $0x8] sm:$0xff]
        %v400 = vld [vmem:[%s382 + $0x10] sm:$0xff]
        %v401 = vld [vmem:[%s382 + $0x18] sm:$0xff]
        %v402 = vld [vmem:[%s382 + $0x20] sm:$0xff]
        %v403 = vld [vmem:[%s382 + $0x28] sm:$0xff]
        %v404 = vld [vmem:[%s382 + $0x30] sm:$0xff]
        %v405 = vld [vmem:[%s382 + $0x38] sm:$0xff]
        %v406 = vld [vmem:[%s382 + $0x40] sm:$0xff]
        %v407 = vld [vmem:[%s382 + $0x48] sm:$0xff]
        %v408 = vld [vmem:[%s382 + $0x50] sm:$0xff]
        %v409 = vld [vmem:[%s382 + $0x58] sm:$0xff]
        %v410 = vld [vmem:[%s382 + $0x60] sm:$0xff]
        %v411 = vld [vmem:[%s382 + $0x68] sm:$0xff]
        %v412 = vld [vmem:[%s382 + $0x70] sm:$0xff]
        %v413 = vld [vmem:[%s382 + $0x78] sm:$0xff]
        %v414 = vld [vmem:[%s382 + $0x80] sm:$0xff]
        %v415 = vld [vmem:[%s382 + $0x88] sm:$0xff]
        %v416 = vld [vmem:[%s382 + $0x90] sm:$0xff]
        %v417 = vld [vmem:[%s382 + $0x98] sm:$0xff]
        %v418 = vld [vmem:[%s382 + $0xa0] sm:$0xff]
        %v419 = vld [vmem:[%s382 + $0xa8] sm:$0xff]
        %v420 = vld [vmem:[%s382 + $0xb0] sm:$0xff]
        %v421 = vld [vmem:[%s382 + $0xb8] sm:$0xff]
        %v422 = vld [vmem:[%s382 + $0xc0] sm:$0xff]
        %v423 = vld [vmem:[%s382 + $0xc8] sm:$0xff]
        %v424 = vld [vmem:[%s382 + $0xd0] sm:$0xff]
        %v425 = vld [vmem:[%s382 + $0xd8] sm:$0xff]
        %v426 = vld [vmem:[%s382 + $0xe0] sm:$0xff]
        %v427 = vld [vmem:[%s382 + $0xe8] sm:$0xff]
        %v428 = vld [vmem:[%s382 + $0xf0] sm:$0xff]
        %v429 = vld [vmem:[%s382 + $0xf8] sm:$0xff]
        %v430 = vpack.c.bf16 %v399, %v398
        %v431 = vpack.c.bf16 %v401, %v400
        %v432 = vpack.c.bf16 %v403, %v402
        %v433 = vpack.c.bf16 %v405, %v404
        %v434 = vpack.c.bf16 %v407, %v406
        %v435 = vpack.c.bf16 %v409, %v408
        %v436 = vpack.c.bf16 %v411, %v410
        %v437 = vpack.c.bf16 %v413, %v412
        %v438 = vpack.c.bf16 %v415, %v414
        %v439 = vpack.c.bf16 %v417, %v416
        %v440 = vpack.c.bf16 %v419, %v418
        %v441 = vpack.c.bf16 %v421, %v420
        %v442 = vpack.c.bf16 %v423, %v422
        %v443 = vpack.c.bf16 %v425, %v424
        %v444 = vpack.c.bf16 %v427, %v426
        %v445 = vpack.c.bf16 %v429, %v428
        %v446 = vld [vmem:[%s4] sm:$0xf]
        %v447 = vld [vmem:[%s4 + $0x4] sm:$0xf]
        %v448 = vld [vmem:[%s4 + $0x8] sm:$0xf]
        %v449 = vld [vmem:[%s4 + $0xc] sm:$0xf]
        %v450 = vld [vmem:[%s5] sm:$0x1]
        %v452 = vlaneseq
        %v453 = vshrl.u32 %v452, 7
        %v454 = vsub.s32 0, %v453
        %v455 = vrot.slane %v450, %v454
        %v461 = vunpack.c.l.b16 %v446
        %v462 = vunpack.c.l.b16 %v447
        %v463 = vunpack.c.l.b16 %v448
        %v464 = vunpack.c.l.b16 %v449
        %v465 = vpack.c.b16 %v462, %v461
        %v466 = vpack.c.b16 %v464, %v463
        %vm469 = vcmask 261120
        %v471 = vsel %vm469, %v430, 0
        %v474 = vsel %vm469, %v431, 0
        %v477 = vsel %vm469, %v432, 0
        %v480 = vsel %vm469, %v433, 0
        %v483 = vsel %vm469, %v434, 0
        %v486 = vsel %vm469, %v435, 0
        %v489 = vsel %vm469, %v436, 0
        %v492 = vsel %vm469, %v437, 0
        %v495 = vsel %vm469, %v438, 0
        %v498 = vsel %vm469, %v439, 0
        %v501 = vsel %vm469, %v440, 0
        %v504 = vsel %vm469, %v441, 0
        %v507 = vsel %vm469, %v442, 0
        %v510 = vsel %vm469, %v443, 0
        %v513 = vsel %vm469, %v444, 0
        %v516 = vsel %vm469, %v445, 0
        %518 = vmatprep.subr.bf16.mxu0 0
        %519 = vmatpush1.bf16.msra.mxu0 %v465
        %520 = vmatprep.subr.bf16.mxu0 0
        %521 = vmatpush1.bf16.msra.mxu0 %v466
        %522 = vmatprep.subr.bf16.mxu0 0
        %523 = vmatpush1.bf16.msra.mxu0 0
        %524 = vmatprep.subr.bf16.mxu0 0
        %525 = vmatpush1.bf16.msra.mxu0 0
        %526 = vmatprep.subr.bf16.mxu0 0
        %527 = vmatpush1.bf16.msra.mxu0 0
        %528 = vmatprep.subr.bf16.mxu0 0
        %529 = vmatpush1.bf16.msra.mxu0 0
        %530 = vmatprep.subr.bf16.mxu0 0
        %531 = vmatpush1.bf16.msra.mxu0 0
        %532 = vmatprep.subr.bf16.mxu0 0
        %533 = vmatpush1.bf16.msra.mxu0 0
        %534 = vmatprep.subr.bf16.mxu0 0
        %535 = vmatpush1.bf16.msra.mxu0 0
        %536 = vmatprep.subr.bf16.mxu0 0
        %537 = vmatpush1.bf16.msra.mxu0 0
        %538 = vmatprep.subr.bf16.mxu0 0
        %539 = vmatpush1.bf16.msra.mxu0 0
        %540 = vmatprep.subr.bf16.mxu0 0
        %541 = vmatpush1.bf16.msra.mxu0 0
        %542 = vmatprep.subr.bf16.mxu0 0
        %543 = vmatpush1.bf16.msra.mxu0 0
        %544 = vmatprep.subr.bf16.mxu0 0
        %545 = vmatpush1.bf16.msra.mxu0 0
        %546 = vmatprep.subr.bf16.mxu0 0
        %547 = vmatpush1.bf16.msra.mxu0 0
        %548 = vmatprep.subr.bf16.mxu0 0
        %549 = vmatpush1.bf16.msra.mxu0 0
        %550 = vmatprep.mubr.bf16.mxu0 0
        %551 = vmatmul.mubr.bf16.gmra.mrb[0].mxu0 %v471
        %v552 = vpop.f32.mrb[0].mxu0
        %v553 = vadd.f32 %v455, %v552
        %v554 = vpop.f32.mrb[0].mxu0
        %v555 = vpop.f32.mrb[0].mxu0
        %v556 = vadd.f32 %v455, %v555
        %v557 = vpop.f32.mrb[0].mxu0
        %558 = vmatprep.mubr.bf16.mxu0 0
        %559 = vmatmul.mubr.bf16.gmra.mrb[0].mxu0 %v474
        %v560 = vpop.f32.mrb[0].mxu0
        %v561 = vadd.f32 %v455, %v560
        %v562 = vpop.f32.mrb[0].mxu0
        %v563 = vpop.f32.mrb[0].mxu0
        %v564 = vadd.f32 %v455, %v563
        %v565 = vpop.f32.mrb[0].mxu0
        %566 = vmatprep.mubr.bf16.mxu0 0
        %567 = vmatmul.mubr.bf16.gmra.mrb[0].mxu0 %v477
        %v568 = vpop.f32.mrb[0].mxu0
        %v569 = vadd.f32 %v455, %v568
        %v570 = vpop.f32.mrb[0].mxu0
        %v571 = vpop.f32.mrb[0].mxu0
        %v572 = vadd.f32 %v455, %v571
        %v573 = vpop.f32.mrb[0].mxu0
        %574 = vmatprep.mubr.bf16.mxu0 0
        %575 = vmatmul.mubr.bf16.gmra.mrb[0].mxu0 %v480
        %v576 = vpop.f32.mrb[0].mxu0
        %v577 = vadd.f32 %v455, %v576
        %v578 = vpop.f32.mrb[0].mxu0
        %v579 = vpop.f32.mrb[0].mxu0
        %v580 = vadd.f32 %v455, %v579
        %v581 = vpop.f32.mrb[0].mxu0
        %582 = vmatprep.mubr.bf16.mxu0 0
        %583 = vmatmul.mubr.bf16.gmra.mrb[0].mxu0 %v483
        %v584 = vpop.f32.mrb[0].mxu0
        %v585 = vadd.f32 %v455, %v584
        %v586 = vpop.f32.mrb[0].mxu0
        %v587 = vpop.f32.mrb[0].mxu0
        %v588 = vadd.f32 %v455, %v587
        %v589 = vpop.f32.mrb[0].mxu0
        %590 = vmatprep.mubr.bf16.mxu0 0
        %591 = vmatmul.mubr.bf16.gmra.mrb[0].mxu0 %v486
        %v592 = vpop.f32.mrb[0].mxu0
        %v593 = vadd.f32 %v455, %v592
        %v594 = vpop.f32.mrb[0].mxu0
        %v595 = vpop.f32.mrb[0].mxu0
        %v596 = vadd.f32 %v455, %v595
        %v597 = vpop.f32.mrb[0].mxu0
        %598 = vmatprep.mubr.bf16.mxu0 0
        %599 = vmatmul.mubr.bf16.gmra.mrb[0].mxu0 %v489
        %v600 = vpop.f32.mrb[0].mxu0
        %v601 = vadd.f32 %v455, %v600
        %v602 = vpop.f32.mrb[0].mxu0
        %v603 = vpop.f32.mrb[0].mxu0
        %v604 = vadd.f32 %v455, %v603
        %v605 = vpop.f32.mrb[0].mxu0
        %606 = vmatprep.mubr.bf16.mxu0 0
        %607 = vmatmul.mubr.bf16.gmra.mrb[0].mxu0 %v492
        %v608 = vpop.f32.mrb[0].mxu0
        %v609 = vadd.f32 %v455, %v608
        %v610 = vpop.f32.mrb[0].mxu0
        %v611 = vpop.f32.mrb[0].mxu0
        %v612 = vadd.f32 %v455, %v611
        %v613 = vpop.f32.mrb[0].mxu0
        %614 = vmatprep.mubr.bf16.mxu0 0
        %615 = vmatmul.mubr.bf16.gmra.mrb[0].mxu0 %v495
        %v616 = vpop.f32.mrb[0].mxu0
        %v617 = vadd.f32 %v455, %v616
        %v618 = vpop.f32.mrb[0].mxu0
        %v619 = vpop.f32.mrb[0].mxu0
        %v620 = vadd.f32 %v455, %v619
        %v621 = vpop.f32.mrb[0].mxu0
        %622 = vmatprep.mubr.bf16.mxu0 0
        %623 = vmatmul.mubr.bf16.gmra.mrb[0].mxu0 %v498
        %v624 = vpop.f32.mrb[0].mxu0
        %v625 = vadd.f32 %v455, %v624
        %v626 = vpop.f32.mrb[0].mxu0
        %v627 = vpop.f32.mrb[0].mxu0
        %v628 = vadd.f32 %v455, %v627
        %v629 = vpop.f32.mrb[0].mxu0
        %630 = vmatprep.mubr.bf16.mxu0 0
        %631 = vmatmul.mubr.bf16.gmra.mrb[0].mxu0 %v501
        %v632 = vpop.f32.mrb[0].mxu0
        %v633 = vadd.f32 %v455, %v632
        %v634 = vpop.f32.mrb[0].mxu0
        %v635 = vpop.f32.mrb[0].mxu0
        %v636 = vadd.f32 %v455, %v635
        %v637 = vpop.f32.mrb[0].mxu0
        %638 = vmatprep.mubr.bf16.mxu0 0
        %639 = vmatmul.mubr.bf16.gmra.mrb[0].mxu0 %v504
        %v640 = vpop.f32.mrb[0].mxu0
        %v641 = vadd.f32 %v455, %v640
        %v642 = vpop.f32.mrb[0].mxu0
        %v643 = vpop.f32.mrb[0].mxu0
        %v644 = vadd.f32 %v455, %v643
        %v645 = vpop.f32.mrb[0].mxu0
        %646 = vmatprep.mubr.bf16.mxu0 0
        %647 = vmatmul.mubr.bf16.gmra.mrb[0].mxu0 %v507
        %v648 = vpop.f32.mrb[0].mxu0
        %v649 = vadd.f32 %v455, %v648
        %v650 = vpop.f32.mrb[0].mxu0
        %v651 = vpop.f32.mrb[0].mxu0
        %v652 = vadd.f32 %v455, %v651
        %v653 = vpop.f32.mrb[0].mxu0
        %654 = vmatprep.mubr.bf16.mxu0 0
        %655 = vmatmul.mubr.bf16.gmra.mrb[0].mxu0 %v510
        %v656 = vpop.f32.mrb[0].mxu0
        %v657 = vadd.f32 %v455, %v656
        %v658 = vpop.f32.mrb[0].mxu0
        %v659 = vpop.f32.mrb[0].mxu0
        %v660 = vadd.f32 %v455, %v659
        %v661 = vpop.f32.mrb[0].mxu0
        %662 = vmatprep.mubr.bf16.mxu0 0
        %663 = vmatmul.mubr.bf16.gmra.mrb[0].mxu0 %v513
        %v664 = vpop.f32.mrb[0].mxu0
        %v665 = vadd.f32 %v455, %v664
        %v666 = vpop.f32.mrb[0].mxu0
        %v667 = vpop.f32.mrb[0].mxu0
        %v668 = vadd.f32 %v455, %v667
        %v669 = vpop.f32.mrb[0].mxu0
        %670 = vmatprep.mubr.bf16.mxu0 0
        %671 = vmatmul.mubr.bf16.gmra.mrb[0].mxu0 %v516
        %v672 = vpop.f32.mrb[0].mxu0
        %v673 = vadd.f32 %v455, %v672
        %v674 = vpop.f32.mrb[0].mxu0
        %v675 = vpop.f32.mrb[0].mxu0
        %v676 = vadd.f32 %v455, %v675
        %v677 = vpop.f32.mrb[0].mxu0
        %678 = vdwg.mxu0
        %v679 = vld [vmem:[%s6] sm:$0xf]
        %v680 = vld [vmem:[%s6 + $0x4] sm:$0xf]
        %v681 = vld [vmem:[%s6 + $0x8] sm:$0xf]
        %v682 = vld [vmem:[%s6 + $0xc] sm:$0xf]
        %v683 = vld [vmem:[%s7] sm:$0x1]
        %v685 = vlaneseq
        %v686 = vshrl.u32 %v685, 7
        %v687 = vsub.s32 0, %v686
        %v688 = vrot.slane %v683, %v687
        %v694 = vunpack.c.l.b16 %v679
        %v695 = vunpack.c.l.b16 %v680
        %v696 = vunpack.c.l.b16 %v681
        %v697 = vunpack.c.l.b16 %v682
        %v698 = vpack.c.b16 %v695, %v694
        %v699 = vpack.c.b16 %v697, %v696
        %702 = vmatprep.subr.bf16.mxu0 0
        %703 = vmatpush1.bf16.msra.mxu0 %v698
        %704 = vmatprep.subr.bf16.mxu0 0
        %705 = vmatpush1.bf16.msra.mxu0 %v699
        %706 = vmatprep.subr.bf16.mxu0 0
        %707 = vmatpush1.bf16.msra.mxu0 0
        %708 = vmatprep.subr.bf16.mxu0 0
        %709 = vmatpush1.bf16.msra.mxu0 0
        %710 = vmatprep.subr.bf16.mxu0 0
        %711 = vmatpush1.bf16.msra.mxu0 0
        %712 = vmatprep.subr.bf16.mxu0 0
        %713 = vmatpush1.bf16.msra.mxu0 0
        %714 = vmatprep.subr.bf16.mxu0 0
        %715 = vmatpush1.bf16.msra.mxu0 0
        %716 = vmatprep.subr.bf16.mxu0 0
        %717 = vmatpush1.bf16.msra.mxu0 0
        %718 = vmatprep.subr.bf16.mxu0 0
        %719 = vmatpush1.bf16.msra.mxu0 0
        %720 = vmatprep.subr.bf16.mxu0 0
        %721 = vmatpush1.bf16.msra.mxu0 0
        %722 = vmatprep.subr.bf16.mxu0 0
        %723 = vmatpush1.bf16.msra.mxu0 0
        %724 = vmatprep.subr.bf16.mxu0 0
        %725 = vmatpush1.bf16.msra.mxu0 0
        %726 = vmatprep.subr.bf16.mxu0 0
        %727 = vmatpush1.bf16.msra.mxu0 0
        %728 = vmatprep.subr.bf16.mxu0 0
        %729 = vmatpush1.bf16.msra.mxu0 0
        %730 = vmatprep.subr.bf16.mxu0 0
        %731 = vmatpush1.bf16.msra.mxu0 0
        %732 = vmatprep.subr.bf16.mxu0 0
        %733 = vmatpush1.bf16.msra.mxu0 0
        %734 = vmatprep.mubr.bf16.mxu0 0
        %735 = vmatmul.mubr.bf16.gmra.mrb[0].mxu0 %v471
        %v736 = vpop.f32.mrb[0].mxu0
        %v737 = vadd.f32 %v688, %v736
        %v738 = vpop.f32.mrb[0].mxu0
        %v739 = vpop.f32.mrb[0].mxu0
        %v740 = vadd.f32 %v688, %v739
        %v741 = vpop.f32.mrb[0].mxu0
        %742 = vmatprep.mubr.bf16.mxu0 0
        %743 = vmatmul.mubr.bf16.gmra.mrb[0].mxu0 %v474
        %v744 = vpop.f32.mrb[0].mxu0
        %v745 = vadd.f32 %v688, %v744
        %v746 = vpop.f32.mrb[0].mxu0
        %v747 = vpop.f32.mrb[0].mxu0
        %v748 = vadd.f32 %v688, %v747
        %v749 = vpop.f32.mrb[0].mxu0
        %750 = vmatprep.mubr.bf16.mxu0 0
        %751 = vmatmul.mubr.bf16.gmra.mrb[0].mxu0 %v477
        %v752 = vpop.f32.mrb[0].mxu0
        %v753 = vadd.f32 %v688, %v752
        %v754 = vpop.f32.mrb[0].mxu0
        %v755 = vpop.f32.mrb[0].mxu0
        %v756 = vadd.f32 %v688, %v755
        %v757 = vpop.f32.mrb[0].mxu0
        %758 = vmatprep.mubr.bf16.mxu0 0
        %759 = vmatmul.mubr.bf16.gmra.mrb[0].mxu0 %v480
        %v760 = vpop.f32.mrb[0].mxu0
        %v761 = vadd.f32 %v688, %v760
        %v762 = vpop.f32.mrb[0].mxu0
        %v763 = vpop.f32.mrb[0].mxu0
        %v764 = vadd.f32 %v688, %v763
        %v765 = vpop.f32.mrb[0].mxu0
        %766 = vmatprep.mubr.bf16.mxu0 0
        %767 = vmatmul.mubr.bf16.gmra.mrb[0].mxu0 %v483
        %v768 = vpop.f32.mrb[0].mxu0
        %v769 = vadd.f32 %v688, %v768
        %v770 = vpop.f32.mrb[0].mxu0
        %v771 = vpop.f32.mrb[0].mxu0
        %v772 = vadd.f32 %v688, %v771
        %v773 = vpop.f32.mrb[0].mxu0
        %774 = vmatprep.mubr.bf16.mxu0 0
        %775 = vmatmul.mubr.bf16.gmra.mrb[0].mxu0 %v486
        %v776 = vpop.f32.mrb[0].mxu0
        %v777 = vadd.f32 %v688, %v776
        %v778 = vpop.f32.mrb[0].mxu0
        %v779 = vpop.f32.mrb[0].mxu0
        %v780 = vadd.f32 %v688, %v779
        %v781 = vpop.f32.mrb[0].mxu0
        %782 = vmatprep.mubr.bf16.mxu0 0
        %783 = vmatmul.mubr.bf16.gmra.mrb[0].mxu0 %v489
        %v784 = vpop.f32.mrb[0].mxu0
        %v785 = vadd.f32 %v688, %v784
        %v786 = vpop.f32.mrb[0].mxu0
        %v787 = vpop.f32.mrb[0].mxu0
        %v788 = vadd.f32 %v688, %v787
        %v789 = vpop.f32.mrb[0].mxu0
        %790 = vmatprep.mubr.bf16.mxu0 0
        %791 = vmatmul.mubr.bf16.gmra.mrb[0].mxu0 %v492
        %v792 = vpop.f32.mrb[0].mxu0
        %v793 = vadd.f32 %v688, %v792
        %v794 = vpop.f32.mrb[0].mxu0
        %v795 = vpop.f32.mrb[0].mxu0
        %v796 = vadd.f32 %v688, %v795
        %v797 = vpop.f32.mrb[0].mxu0
        %798 = vmatprep.mubr.bf16.mxu0 0
        %799 = vmatmul.mubr.bf16.gmra.mrb[0].mxu0 %v495
        %v800 = vpop.f32.mrb[0].mxu0
        %v801 = vadd.f32 %v688, %v800
        %v802 = vpop.f32.mrb[0].mxu0
        %v803 = vpop.f32.mrb[0].mxu0
        %v804 = vadd.f32 %v688, %v803
        %v805 = vpop.f32.mrb[0].mxu0
        %806 = vmatprep.mubr.bf16.mxu0 0
        %807 = vmatmul.mubr.bf16.gmra.mrb[0].mxu0 %v498
        %v808 = vpop.f32.mrb[0].mxu0
        %v809 = vadd.f32 %v688, %v808
        %v810 = vpop.f32.mrb[0].mxu0
        %v811 = vpop.f32.mrb[0].mxu0
        %v812 = vadd.f32 %v688, %v811
        %v813 = vpop.f32.mrb[0].mxu0
        %814 = vmatprep.mubr.bf16.mxu0 0
        %815 = vmatmul.mubr.bf16.gmra.mrb[0].mxu0 %v501
        %v816 = vpop.f32.mrb[0].mxu0
        %v817 = vadd.f32 %v688, %v816
        %v818 = vpop.f32.mrb[0].mxu0
        %v819 = vpop.f32.mrb[0].mxu0
        %v820 = vadd.f32 %v688, %v819
        %v821 = vpop.f32.mrb[0].mxu0
        %822 = vmatprep.mubr.bf16.mxu0 0
        %823 = vmatmul.mubr.bf16.gmra.mrb[0].mxu0 %v504
        %v824 = vpop.f32.mrb[0].mxu0
        %v825 = vadd.f32 %v688, %v824
        %v826 = vpop.f32.mrb[0].mxu0
        %v827 = vpop.f32.mrb[0].mxu0
        %v828 = vadd.f32 %v688, %v827
        %v829 = vpop.f32.mrb[0].mxu0
        %830 = vmatprep.mubr.bf16.mxu0 0
        %831 = vmatmul.mubr.bf16.gmra.mrb[0].mxu0 %v507
        %v832 = vpop.f32.mrb[0].mxu0
        %v833 = vadd.f32 %v688, %v832
        %v834 = vpop.f32.mrb[0].mxu0
        %v835 = vpop.f32.mrb[0].mxu0
        %v836 = vadd.f32 %v688, %v835
        %v837 = vpop.f32.mrb[0].mxu0
        %838 = vmatprep.mubr.bf16.mxu0 0
        %839 = vmatmul.mubr.bf16.gmra.mrb[0].mxu0 %v510
        %v840 = vpop.f32.mrb[0].mxu0
        %v841 = vadd.f32 %v688, %v840
        %v842 = vpop.f32.mrb[0].mxu0
        %v843 = vpop.f32.mrb[0].mxu0
        %v844 = vadd.f32 %v688, %v843
        %v845 = vpop.f32.mrb[0].mxu0
        %846 = vmatprep.mubr.bf16.mxu0 0
        %847 = vmatmul.mubr.bf16.gmra.mrb[0].mxu0 %v513
        %v848 = vpop.f32.mrb[0].mxu0
        %v849 = vadd.f32 %v688, %v848
        %v850 = vpop.f32.mrb[0].mxu0
        %v851 = vpop.f32.mrb[0].mxu0
        %v852 = vadd.f32 %v688, %v851
        %v853 = vpop.f32.mrb[0].mxu0
        %854 = vmatprep.mubr.bf16.mxu0 0
        %855 = vmatmul.mubr.bf16.gmra.mrb[0].mxu0 %v516
        %v856 = vpop.f32.mrb[0].mxu0
        %v857 = vadd.f32 %v688, %v856
        %v858 = vpop.f32.mrb[0].mxu0
        %v859 = vpop.f32.mrb[0].mxu0
        %v860 = vadd.f32 %v688, %v859
        %v861 = vpop.f32.mrb[0].mxu0
        %862 = vdwg.mxu0
        %v863 = vpack.c.bf16 %v556, %v553
        %v864 = vpack.c.bf16 %v564, %v561
        %v865 = vpack.c.bf16 %v572, %v569
        %v866 = vpack.c.bf16 %v580, %v577
        %v867 = vpack.c.bf16 %v588, %v585
        %v868 = vpack.c.bf16 %v596, %v593
        %v869 = vpack.c.bf16 %v604, %v601
        %v870 = vpack.c.bf16 %v612, %v609
        %v871 = vpack.c.bf16 %v620, %v617
        %v872 = vpack.c.bf16 %v628, %v625
        %v873 = vpack.c.bf16 %v636, %v633
        %v874 = vpack.c.bf16 %v644, %v641
        %v875 = vpack.c.bf16 %v652, %v649
        %v876 = vpack.c.bf16 %v660, %v657
        %v877 = vpack.c.bf16 %v668, %v665
        %v878 = vpack.c.bf16 %v676, %v673
        %879 = vst [vmem:[#allocation2] sm:$0xff] %v863
        %880 = vst [vmem:[#allocation2 + $0x8] sm:$0xff] %v864
        %881 = vst [vmem:[#allocation2 + $0x10] sm:$0xff] %v865
        %882 = vst [vmem:[#allocation2 + $0x18] sm:$0xff] %v866
        %883 = vst [vmem:[#allocation2 + $0x20] sm:$0xff] %v867
        %884 = vst [vmem:[#allocation2 + $0x28] sm:$0xff] %v868
        %885 = vst [vmem:[#allocation2 + $0x30] sm:$0xff] %v869
        %886 = vst [vmem:[#allocation2 + $0x38] sm:$0xff] %v870
        %887 = vst [vmem:[#allocation2 + $0x40] sm:$0xff] %v871
        %888 = vst [vmem:[#allocation2 + $0x48] sm:$0xff] %v872
        %889 = vst [vmem:[#allocation2 + $0x50] sm:$0xff] %v873
        %890 = vst [vmem:[#allocation2 + $0x58] sm:$0xff] %v874
        %891 = vst [vmem:[#allocation2 + $0x60] sm:$0xff] %v875
        %892 = vst [vmem:[#allocation2 + $0x68] sm:$0xff] %v876
        %893 = vst [vmem:[#allocation2 + $0x70] sm:$0xff] %v877
        %894 = vst [vmem:[#allocation2 + $0x78] sm:$0xff] %v878
        %v895 = vpack.c.bf16 %v740, %v737
        %v896 = vpack.c.bf16 %v748, %v745
        %v897 = vpack.c.bf16 %v756, %v753
        %v898 = vpack.c.bf16 %v764, %v761
        %v899 = vpack.c.bf16 %v772, %v769
        %v900 = vpack.c.bf16 %v780, %v777
        %v901 = vpack.c.bf16 %v788, %v785
        %v902 = vpack.c.bf16 %v796, %v793
        %v903 = vpack.c.bf16 %v804, %v801
        %v904 = vpack.c.bf16 %v812, %v809
        %v905 = vpack.c.bf16 %v820, %v817
        %v906 = vpack.c.bf16 %v828, %v825
        %v907 = vpack.c.bf16 %v836, %v833
        %v908 = vpack.c.bf16 %v844, %v841
        %v909 = vpack.c.bf16 %v852, %v849
        %v910 = vpack.c.bf16 %v860, %v857
        %911 = vst.msk [vmem:[#allocation3] sm:$0xff] %vm469, %v895
        %912 = vst.msk [vmem:[#allocation3 + $0x8] sm:$0xff] %vm469, %v896
        %913 = vst.msk [vmem:[#allocation3 + $0x10] sm:$0xff] %vm469, %v897
        %914 = vst.msk [vmem:[#allocation3 + $0x18] sm:$0xff] %vm469, %v898
        %915 = vst.msk [vmem:[#allocation3 + $0x20] sm:$0xff] %vm469, %v899
        %916 = vst.msk [vmem:[#allocation3 + $0x28] sm:$0xff] %vm469, %v900
        %917 = vst.msk [vmem:[#allocation3 + $0x30] sm:$0xff] %vm469, %v901
        %918 = vst.msk [vmem:[#allocation3 + $0x38] sm:$0xff] %vm469, %v902
        %919 = vst.msk [vmem:[#allocation3 + $0x40] sm:$0xff] %vm469, %v903
        %920 = vst.msk [vmem:[#allocation3 + $0x48] sm:$0xff] %vm469, %v904
        %921 = vst.msk [vmem:[#allocation3 + $0x50] sm:$0xff] %vm469, %v905
        %922 = vst.msk [vmem:[#allocation3 + $0x58] sm:$0xff] %vm469, %v906
        %923 = vst.msk [vmem:[#allocation3 + $0x60] sm:$0xff] %vm469, %v907
        %924 = vst.msk [vmem:[#allocation3 + $0x68] sm:$0xff] %vm469, %v908
        %925 = vst.msk [vmem:[#allocation3 + $0x70] sm:$0xff] %vm469, %v909
        %926 = vst.msk [vmem:[#allocation3 + $0x78] sm:$0xff] %vm469, %v910
      $region60: #{tpu_custom_call.1} parent=55 // pred_fallthru
        _
      %v927 = vld [vmem:[%s376] sm:$0xff]
      %v928 = vld [vmem:[%s376 + $0x8] sm:$0xff]
      %v929 = vld [vmem:[%s376 + $0x10] sm:$0xff]
      %v930 = vld [vmem:[%s376 + $0x18] sm:$0xff]
      %v931 = vld [vmem:[%s376 + $0x20] sm:$0xff]
      %v932 = vld [vmem:[%s376 + $0x28] sm:$0xff]
      %v933 = vld [vmem:[%s376 + $0x30] sm:$0xff]
      %v934 = vld [vmem:[%s376 + $0x38] sm:$0xff]
      %v935 = vld [vmem:[%s376 + $0x40] sm:$0xff]
      %v936 = vld [vmem:[%s376 + $0x48] sm:$0xff]
      %v937 = vld [vmem:[%s376 + $0x50] sm:$0xff]
      %v938 = vld [vmem:[%s376 + $0x58] sm:$0xff]
      %v939 = vld [vmem:[%s376 + $0x60] sm:$0xff]
      %v940 = vld [vmem:[%s376 + $0x68] sm:$0xff]
      %v941 = vld [vmem:[%s376 + $0x70] sm:$0xff]
      %v942 = vld [vmem:[%s376 + $0x78] sm:$0xff]
      %v943 = vld [vmem:[%s376 + $0x80] sm:$0xff]
      %v944 = vld [vmem:[%s376 + $0x88] sm:$0xff]
      %v945 = vld [vmem:[%s376 + $0x90] sm:$0xff]
      %v946 = vld [vmem:[%s376 + $0x98] sm:$0xff]
      %v947 = vld [vmem:[%s376 + $0xa0] sm:$0xff]
      %v948 = vld [vmem:[%s376 + $0xa8] sm:$0xff]
      %v949 = vld [vmem:[%s376 + $0xb0] sm:$0xff]
      %v950 = vld [vmem:[%s376 + $0xb8] sm:$0xff]
      %v951 = vld [vmem:[%s376 + $0xc0] sm:$0xff]
      %v952 = vld [vmem:[%s376 + $0xc8] sm:$0xff]
      %v953 = vld [vmem:[%s376 + $0xd0] sm:$0xff]
      %v954 = vld [vmem:[%s376 + $0xd8] sm:$0xff]
      %v955 = vld [vmem:[%s376 + $0xe0] sm:$0xff]
      %v956 = vld [vmem:[%s376 + $0xe8] sm:$0xff]
      %v957 = vld [vmem:[%s376 + $0xf0] sm:$0xff]
      %v958 = vld [vmem:[%s376 + $0xf8] sm:$0xff]
      %v959 = vpack.c.bf16 %v928, %v927
      %v960 = vpack.c.bf16 %v930, %v929
      %v961 = vpack.c.bf16 %v932, %v931
      %v962 = vpack.c.bf16 %v934, %v933
      %v963 = vpack.c.bf16 %v936, %v935
      %v964 = vpack.c.bf16 %v938, %v937
      %v965 = vpack.c.bf16 %v940, %v939
      %v966 = vpack.c.bf16 %v942, %v941
      %v967 = vpack.c.bf16 %v944, %v943
      %v968 = vpack.c.bf16 %v946, %v945
      %v969 = vpack.c.bf16 %v948, %v947
      %v970 = vpack.c.bf16 %v950, %v949
      %v971 = vpack.c.bf16 %v952, %v951
      %v972 = vpack.c.bf16 %v954, %v953
      %v973 = vpack.c.bf16 %v956, %v955
      %v974 = vpack.c.bf16 %v958, %v957
      %v975 = vld [vmem:[%s2] sm:$0xf]
      %v976 = vld [vmem:[%s2 + $0x4] sm:$0xf]
      %v977 = vld [vmem:[%s2 + $0x8] sm:$0xf]
      %v978 = vld [vmem:[%s2 + $0xc] sm:$0xf]
      %v979 = vld [vmem:[%s3] sm:$0x1]
      %v981 = vlaneseq
      %v982 = vshrl.u32 %v981, 7
      %v983 = vsub.s32 0, %v982
      %v984 = vrot.slane %v979, %v983
      %v990 = vunpack.c.l.b16 %v975
      %v991 = vunpack.c.l.b16 %v976
      %v992 = vunpack.c.l.b16 %v977
      %v993 = vunpack.c.l.b16 %v978
      %v994 = vpack.c.b16 %v991, %v990
      %v995 = vpack.c.b16 %v993, %v992
      %vm998 = vcmask 261120
      %v1000 = vsel %vm998, %v959, 0
      %v1003 = vsel %vm998, %v960, 0
      %v1006 = vsel %vm998, %v961, 0
      %v1009 = vsel %vm998, %v962, 0
      %v1012 = vsel %vm998, %v963, 0
      %v1015 = vsel %vm998, %v964, 0
      %v1018 = vsel %vm998, %v965, 0
      %v1021 = vsel %vm998, %v966, 0
      %v1024 = vsel %vm998, %v967, 0
      %v1027 = vsel %vm998, %v968, 0
      %v1030 = vsel %vm998, %v969, 0
      %v1033 = vsel %vm998, %v970, 0
      %v1036 = vsel %vm998, %v971, 0
      %v1039 = vsel %vm998, %v972, 0
      %v1042 = vsel %vm998, %v973, 0
      %v1045 = vsel %vm998, %v974, 0
      %1047 = vmatprep.subr.bf16.mxu0 0
      %1048 = vmatpush1.bf16.msra.mxu0 %v994
      %1049 = vmatprep.subr.bf16.mxu0 0
      %1050 = vmatpush1.bf16.msra.mxu0 %v995
      %1051 = vmatprep.subr.bf16.mxu0 0
      %1052 = vmatpush1.bf16.msra.mxu0 0
      %1053 = vmatprep.subr.bf16.mxu0 0
      %1054 = vmatpush1.bf16.msra.mxu0 0
      %1055 = vmatprep.subr.bf16.mxu0 0
      %1056 = vmatpush1.bf16.msra.mxu0 0
      %1057 = vmatprep.subr.bf16.mxu0 0
      %1058 = vmatpush1.bf16.msra.mxu0 0
      %1059 = vmatprep.subr.bf16.mxu0 0
      %1060 = vmatpush1.bf16.msra.mxu0 0
      %1061 = vmatprep.subr.bf16.mxu0 0
      %1062 = vmatpush1.bf16.msra.mxu0 0
      %1063 = vmatprep.subr.bf16.mxu0 0
      %1064 = vmatpush1.bf16.msra.mxu0 0
      %1065 = vmatprep.subr.bf16.mxu0 0
      %1066 = vmatpush1.bf16.msra.mxu0 0
      %1067 = vmatprep.subr.bf16.mxu0 0
      %1068 = vmatpush1.bf16.msra.mxu0 0
      %1069 = vmatprep.subr.bf16.mxu0 0
      %1070 = vmatpush1.bf16.msra.mxu0 0
      %1071 = vmatprep.subr.bf16.mxu0 0
      %1072 = vmatpush1.bf16.msra.mxu0 0
      %1073 = vmatprep.subr.bf16.mxu0 0
      %1074 = vmatpush1.bf16.msra.mxu0 0
      %1075 = vmatprep.subr.bf16.mxu0 0
      %1076 = vmatpush1.bf16.msra.mxu0 0
      %1077 = vmatprep.subr.bf16.mxu0 0
      %1078 = vmatpush1.bf16.msra.mxu0 0
      %1079 = vmatprep.mubr.bf16.mxu0 0
      %1080 = vmatmul.mubr.bf16.gmra.mrb[0].mxu0 %v1000
      %v1081 = vpop.f32.mrb[0].mxu0
      %v1082 = vadd.f32 %v984, %v1081
      %v1083 = vpop.f32.mrb[0].mxu0
      %v1084 = vpop.f32.mrb[0].mxu0
      %v1085 = vadd.f32 %v984, %v1084
      %v1086 = vpop.f32.mrb[0].mxu0
      %1087 = vmatprep.mubr.bf16.mxu0 0
      %1088 = vmatmul.mubr.bf16.gmra.mrb[0].mxu0 %v1003
      %v1089 = vpop.f32.mrb[0].mxu0
      %v1090 = vadd.f32 %v984, %v1089
      %v1091 = vpop.f32.mrb[0].mxu0
      %v1092 = vpop.f32.mrb[0].mxu0
      %v1093 = vadd.f32 %v984, %v1092
      %v1094 = vpop.f32.mrb[0].mxu0
      %1095 = vmatprep.mubr.bf16.mxu0 0
      %1096 = vmatmul.mubr.bf16.gmra.mrb[0].mxu0 %v1006
      %v1097 = vpop.f32.mrb[0].mxu0
      %v1098 = vadd.f32 %v984, %v1097
      %v1099 = vpop.f32.mrb[0].mxu0
      %v1100 = vpop.f32.mrb[0].mxu0
      %v1101 = vadd.f32 %v984, %v1100
      %v1102 = vpop.f32.mrb[0].mxu0
      %1103 = vmatprep.mubr.bf16.mxu0 0
      %1104 = vmatmul.mubr.bf16.gmra.mrb[0].mxu0 %v1009
      %v1105 = vpop.f32.mrb[0].mxu0
      %v1106 = vadd.f32 %v984, %v1105
      %v1107 = vpop.f32.mrb[0].mxu0
      %v1108 = vpop.f32.mrb[0].mxu0
      %v1109 = vadd.f32 %v984, %v1108
      %v1110 = vpop.f32.mrb[0].mxu0
      %1111 = vmatprep.mubr.bf16.mxu0 0
      %1112 = vmatmul.mubr.bf16.gmra.mrb[0].mxu0 %v1012
      %v1113 = vpop.f32.mrb[0].mxu0
      %v1114 = vadd.f32 %v984, %v1113
      %v1115 = vpop.f32.mrb[0].mxu0
      %v1116 = vpop.f32.mrb[0].mxu0
      %v1117 = vadd.f32 %v984, %v1116
      %v1118 = vpop.f32.mrb[0].mxu0
      %1119 = vmatprep.mubr.bf16.mxu0 0
      %1120 = vmatmul.mubr.bf16.gmra.mrb[0].mxu0 %v1015
      %v1121 = vpop.f32.mrb[0].mxu0
      %v1122 = vadd.f32 %v984, %v1121
      %v1123 = vpop.f32.mrb[0].mxu0
      %v1124 = vpop.f32.mrb[0].mxu0
      %v1125 = vadd.f32 %v984, %v1124
      %v1126 = vpop.f32.mrb[0].mxu0
      %1127 = vmatprep.mubr.bf16.mxu0 0
      %1128 = vmatmul.mubr.bf16.gmra.mrb[0].mxu0 %v1018
      %v1129 = vpop.f32.mrb[0].mxu0
      %v1130 = vadd.f32 %v984, %v1129
      %v1131 = vpop.f32.mrb[0].mxu0
      %v1132 = vpop.f32.mrb[0].mxu0
      %v1133 = vadd.f32 %v984, %v1132
      %v1134 = vpop.f32.mrb[0].mxu0
      %1135 = vmatprep.mubr.bf16.mxu0 0
      %1136 = vmatmul.mubr.bf16.gmra.mrb[0].mxu0 %v1021
      %v1137 = vpop.f32.mrb[0].mxu0
      %v1138 = vadd.f32 %v984, %v1137
      %v1139 = vpop.f32.mrb[0].mxu0
      %v1140 = vpop.f32.mrb[0].mxu0
      %v1141 = vadd.f32 %v984, %v1140
      %v1142 = vpop.f32.mrb[0].mxu0
      %1143 = vmatprep.mubr.bf16.mxu0 0
      %1144 = vmatmul.mubr.bf16.gmra.mrb[0].mxu0 %v1024
      %v1145 = vpop.f32.mrb[0].mxu0
      %v1146 = vadd.f32 %v984, %v1145
      %v1147 = vpop.f32.mrb[0].mxu0
      %v1148 = vpop.f32.mrb[0].mxu0
      %v1149 = vadd.f32 %v984, %v1148
      %v1150 = vpop.f32.mrb[0].mxu0
      %1151 = vmatprep.mubr.bf16.mxu0 0
      %1152 = vmatmul.mubr.bf16.gmra.mrb[0].mxu0 %v1027
      %v1153 = vpop.f32.mrb[0].mxu0
      %v1154 = vadd.f32 %v984, %v1153
      %v1155 = vpop.f32.mrb[0].mxu0
      %v1156 = vpop.f32.mrb[0].mxu0
      %v1157 = vadd.f32 %v984, %v1156
      %v1158 = vpop.f32.mrb[0].mxu0
      %1159 = vmatprep.mubr.bf16.mxu0 0
      %1160 = vmatmul.mubr.bf16.gmra.mrb[0].mxu0 %v1030
      %v1161 = vpop.f32.mrb[0].mxu0
      %v1162 = vadd.f32 %v984, %v1161
      %v1163 = vpop.f32.mrb[0].mxu0
      %v1164 = vpop.f32.mrb[0].mxu0
      %v1165 = vadd.f32 %v984, %v1164
      %v1166 = vpop.f32.mrb[0].mxu0
      %1167 = vmatprep.mubr.bf16.mxu0 0
      %1168 = vmatmul.mubr.bf16.gmra.mrb[0].mxu0 %v1033
      %v1169 = vpop.f32.mrb[0].mxu0
      %v1170 = vadd.f32 %v984, %v1169
      %v1171 = vpop.f32.mrb[0].mxu0
      %v1172 = vpop.f32.mrb[0].mxu0
      %v1173 = vadd.f32 %v984, %v1172
      %v1174 = vpop.f32.mrb[0].mxu0
      %1175 = vmatprep.mubr.bf16.mxu0 0
      %1176 = vmatmul.mubr.bf16.gmra.mrb[0].mxu0 %v1036
      %v1177 = vpop.f32.mrb[0].mxu0
      %v1178 = vadd.f32 %v984, %v1177
      %v1179 = vpop.f32.mrb[0].mxu0
      %v1180 = vpop.f32.mrb[0].mxu0
      %v1181 = vadd.f32 %v984, %v1180
      %v1182 = vpop.f32.mrb[0].mxu0
      %1183 = vmatprep.mubr.bf16.mxu0 0
      %1184 = vmatmul.mubr.bf16.gmra.mrb[0].mxu0 %v1039
      %v1185 = vpop.f32.mrb[0].mxu0
      %v1186 = vadd.f32 %v984, %v1185
      %v1187 = vpop.f32.mrb[0].mxu0
      %v1188 = vpop.f32.mrb[0].mxu0
      %v1189 = vadd.f32 %v984, %v1188
      %v1190 = vpop.f32.mrb[0].mxu0
      %1191 = vmatprep.mubr.bf16.mxu0 0
      %1192 = vmatmul.mubr.bf16.gmra.mrb[0].mxu0 %v1042
      %v1193 = vpop.f32.mrb[0].mxu0
      %v1194 = vadd.f32 %v984, %v1193
      %v1195 = vpop.f32.mrb[0].mxu0
      %v1196 = vpop.f32.mrb[0].mxu0
      %v1197 = vadd.f32 %v984, %v1196
      %v1198 = vpop.f32.mrb[0].mxu0
      %1199 = vmatprep.mubr.bf16.mxu0 0
      %1200 = vmatmul.mubr.bf16.gmra.mrb[0].mxu0 %v1045
      %v1201 = vpop.f32.mrb[0].mxu0
      %v1202 = vadd.f32 %v984, %v1201
      %v1203 = vpop.f32.mrb[0].mxu0
      %v1204 = vpop.f32.mrb[0].mxu0
      %v1205 = vadd.f32 %v984, %v1204
      %v1206 = vpop.f32.mrb[0].mxu0
      %1207 = vdwg.mxu0
      %v1208 = vpack.c.bf16 %v1085, %v1082
      %v1209 = vpack.c.bf16 %v1093, %v1090
      %v1210 = vpack.c.bf16 %v1101, %v1098
      %v1211 = vpack.c.bf16 %v1109, %v1106
      %v1212 = vpack.c.bf16 %v1117, %v1114
      %v1213 = vpack.c.bf16 %v1125, %v1122
      %v1214 = vpack.c.bf16 %v1133, %v1130
      %v1215 = vpack.c.bf16 %v1141, %v1138
      %v1216 = vpack.c.bf16 %v1149, %v1146
      %v1217 = vpack.c.bf16 %v1157, %v1154
      %v1218 = vpack.c.bf16 %v1165, %v1162
      %v1219 = vpack.c.bf16 %v1173, %v1170
      %v1220 = vpack.c.bf16 %v1181, %v1178
      %v1221 = vpack.c.bf16 %v1189, %v1186
      %v1222 = vpack.c.bf16 %v1197, %v1194
      %v1223 = vpack.c.bf16 %v1205, %v1202
      %v1224 = vld [vmem:[#allocation2] sm:$0xff]
      %v1225 = vld [vmem:[#allocation2 + $0x8] sm:$0xff]
      %v1226 = vld [vmem:[#allocation2 + $0x10] sm:$0xff]
      %v1227 = vld [vmem:[#allocation2 + $0x18] sm:$0xff]
      %v1228 = vld [vmem:[#allocation2 + $0x20] sm:$0xff]
      %v1229 = vld [vmem:[#allocation2 + $0x28] sm:$0xff]
      %v1230 = vld [vmem:[#allocation2 + $0x30] sm:$0xff]
      %v1231 = vld [vmem:[#allocation2 + $0x38] sm:$0xff]
      %v1232 = vld [vmem:[#allocation2 + $0x40] sm:$0xff]
      %v1233 = vld [vmem:[#allocation2 + $0x48] sm:$0xff]
      %v1234 = vld [vmem:[#allocation2 + $0x50] sm:$0xff]
      %v1235 = vld [vmem:[#allocation2 + $0x58] sm:$0xff]
      %v1236 = vld [vmem:[#allocation2 + $0x60] sm:$0xff]
      %v1237 = vld [vmem:[#allocation2 + $0x68] sm:$0xff]
      %v1238 = vld [vmem:[#allocation2 + $0x70] sm:$0xff]
      %v1239 = vld [vmem:[#allocation2 + $0x78] sm:$0xff]
      %1240 = vmatprep.subr.bf16.mxu0 0
      %1241 = vmatpush1.bf16.xpose.msra.mxu0 %v1224
      %1242 = vmatprep.subr.bf16.mxu0 0
      %1243 = vmatpush1.bf16.xpose.msra.mxu0 %v1225
      %1244 = vmatprep.subr.bf16.mxu0 0
      %1245 = vmatpush1.bf16.xpose.msra.mxu0 %v1226
      %1246 = vmatprep.subr.bf16.mxu0 0
      %1247 = vmatpush1.bf16.xpose.msra.mxu0 %v1227
      %1248 = vmatprep.subr.bf16.mxu0 0
      %1249 = vmatpush1.bf16.xpose.msra.mxu0 %v1228
      %1250 = vmatprep.subr.bf16.mxu0 0
      %1251 = vmatpush1.bf16.xpose.msra.mxu0 %v1229
      %1252 = vmatprep.subr.bf16.mxu0 0
      %1253 = vmatpush1.bf16.xpose.msra.mxu0 %v1230
      %1254 = vmatprep.subr.bf16.mxu0 0
      %1255 = vmatpush1.bf16.xpose.msra.mxu0 %v1231
      %1256 = vmatprep.subr.bf16.mxu0 0
      %1257 = vmatpush1.bf16.xpose.msra.mxu0 %v1232
      %1258 = vmatprep.subr.bf16.mxu0 0
      %1259 = vmatpush1.bf16.xpose.msra.mxu0 %v1233
      %1260 = vmatprep.subr.bf16.mxu0 0
      %1261 = vmatpush1.bf16.xpose.msra.mxu0 %v1234
      %1262 = vmatprep.subr.bf16.mxu0 0
      %1263 = vmatpush1.bf16.xpose.msra.mxu0 %v1235
      %1264 = vmatprep.subr.bf16.mxu0 0
      %1265 = vmatpush1.bf16.xpose.msra.mxu0 %v1236
      %1266 = vmatprep.subr.bf16.mxu0 0
      %1267 = vmatpush1.bf16.xpose.msra.mxu0 %v1237
      %1268 = vmatprep.subr.bf16.mxu0 0
      %1269 = vmatpush1.bf16.xpose.msra.mxu0 %v1238
      %1270 = vmatprep.subr.bf16.mxu0 0
      %1271 = vmatpush1.bf16.xpose.msra.mxu0 %v1239
      %1272 = vmatprep.mubr.bf16.mxu0 0
      %1273 = vmatmul.mubr.bf16.gmra.mrb[0].mxu0 %v1208
      %v1274 = vpop.f32.mrb[0].mxu0
      %v1275 = vadd.f32 0.0, %v1274
      %v1276 = vpop.f32.mrb[0].mxu0
      %v1277 = vadd.f32 0.0, %v1276
      %v1278 = vpop.f32.mrb[0].mxu0
      %v1279 = vadd.f32 0.0, %v1278
      %v1280 = vpop.f32.mrb[0].mxu0
      %v1281 = vadd.f32 0.0, %v1280
      %1282 = vmatprep.mubr.bf16.mxu0 0
      %1283 = vmatmul.mubr.bf16.gmra.mrb[0].mxu0 %v1209
      %v1284 = vpop.f32.mrb[0].mxu0
      %v1285 = vadd.f32 0.0, %v1284
      %v1286 = vpop.f32.mrb[0].mxu0
      %v1287 = vadd.f32 0.0, %v1286
      %v1288 = vpop.f32.mrb[0].mxu0
      %v1289 = vadd.f32 0.0, %v1288
      %v1290 = vpop.f32.mrb[0].mxu0
      %v1291 = vadd.f32 0.0, %v1290
      %1292 = vmatprep.mubr.bf16.mxu0 0
      %1293 = vmatmul.mubr.bf16.gmra.mrb[0].mxu0 %v1210
      %v1294 = vpop.f32.mrb[0].mxu0
      %v1295 = vadd.f32 0.0, %v1294
      %v1296 = vpop.f32.mrb[0].mxu0
      %v1297 = vadd.f32 0.0, %v1296
      %v1298 = vpop.f32.mrb[0].mxu0
      %v1299 = vadd.f32 0.0, %v1298
      %v1300 = vpop.f32.mrb[0].mxu0
      %v1301 = vadd.f32 0.0, %v1300
      %1302 = vmatprep.mubr.bf16.mxu0 0
      %1303 = vmatmul.mubr.bf16.gmra.mrb[0].mxu0 %v1211
      %v1304 = vpop.f32.mrb[0].mxu0
      %v1305 = vadd.f32 0.0, %v1304
      %v1306 = vpop.f32.mrb[0].mxu0
      %v1307 = vadd.f32 0.0, %v1306
      %v1308 = vpop.f32.mrb[0].mxu0
      %v1309 = vadd.f32 0.0, %v1308
      %v1310 = vpop.f32.mrb[0].mxu0
      %v1311 = vadd.f32 0.0, %v1310
      %1312 = vmatprep.mubr.bf16.mxu0 0
      %1313 = vmatmul.mubr.bf16.gmra.mrb[0].mxu0 %v1212
      %v1314 = vpop.f32.mrb[0].mxu0
      %v1315 = vadd.f32 0.0, %v1314
      %v1316 = vpop.f32.mrb[0].mxu0
      %v1317 = vadd.f32 0.0, %v1316
      %v1318 = vpop.f32.mrb[0].mxu0
      %v1319 = vadd.f32 0.0, %v1318
      %v1320 = vpop.f32.mrb[0].mxu0
      %v1321 = vadd.f32 0.0, %v1320
      %1322 = vmatprep.mubr.bf16.mxu0 0
      %1323 = vmatmul.mubr.bf16.gmra.mrb[0].mxu0 %v1213
      %v1324 = vpop.f32.mrb[0].mxu0
      %v1325 = vadd.f32 0.0, %v1324
      %v1326 = vpop.f32.mrb[0].mxu0
      %v1327 = vadd.f32 0.0, %v1326
      %v1328 = vpop.f32.mrb[0].mxu0
      %v1329 = vadd.f32 0.0, %v1328
      %v1330 = vpop.f32.mrb[0].mxu0
      %v1331 = vadd.f32 0.0, %v1330
      %1332 = vmatprep.mubr.bf16.mxu0 0
      %1333 = vmatmul.mubr.bf16.gmra.mrb[0].mxu0 %v1214
      %v1334 = vpop.f32.mrb[0].mxu0
      %v1335 = vadd.f32 0.0, %v1334
      %v1336 = vpop.f32.mrb[0].mxu0
      %v1337 = vadd.f32 0.0, %v1336
      %v1338 = vpop.f32.mrb[0].mxu0
      %v1339 = vadd.f32 0.0, %v1338
      %v1340 = vpop.f32.mrb[0].mxu0
      %v1341 = vadd.f32 0.0, %v1340
      %1342 = vmatprep.mubr.bf16.mxu0 0
      %1343 = vmatmul.mubr.bf16.gmra.mrb[0].mxu0 %v1215
      %v1344 = vpop.f32.mrb[0].mxu0
      %v1345 = vadd.f32 0.0, %v1344
      %v1346 = vpop.f32.mrb[0].mxu0
      %v1347 = vadd.f32 0.0, %v1346
      %v1348 = vpop.f32.mrb[0].mxu0
      %v1349 = vadd.f32 0.0, %v1348
      %v1350 = vpop.f32.mrb[0].mxu0
      %v1351 = vadd.f32 0.0, %v1350
      %1352 = vmatprep.mubr.bf16.mxu0 0
      %1353 = vmatmul.mubr.bf16.gmra.mrb[0].mxu0 %v1216
      %v1354 = vpop.f32.mrb[0].mxu0
      %v1355 = vadd.f32 0.0, %v1354
      %v1356 = vpop.f32.mrb[0].mxu0
      %v1357 = vadd.f32 0.0, %v1356
      %v1358 = vpop.f32.mrb[0].mxu0
      %v1359 = vadd.f32 0.0, %v1358
      %v1360 = vpop.f32.mrb[0].mxu0
      %v1361 = vadd.f32 0.0, %v1360
      %1362 = vmatprep.mubr.bf16.mxu0 0
      %1363 = vmatmul.mubr.bf16.gmra.mrb[0].mxu0 %v1217
      %v1364 = vpop.f32.mrb[0].mxu0
      %v1365 = vadd.f32 0.0, %v1364
      %v1366 = vpop.f32.mrb[0].mxu0
      %v1367 = vadd.f32 0.0, %v1366
      %v1368 = vpop.f32.mrb[0].mxu0
      %v1369 = vadd.f32 0.0, %v1368
      %v1370 = vpop.f32.mrb[0].mxu0
      %v1371 = vadd.f32 0.0, %v1370
      %1372 = vmatprep.mubr.bf16.mxu0 0
      %1373 = vmatmul.mubr.bf16.gmra.mrb[0].mxu0 %v1218
      %v1374 = vpop.f32.mrb[0].mxu0
      %v1375 = vadd.f32 0.0, %v1374
      %v1376 = vpop.f32.mrb[0].mxu0
      %v1377 = vadd.f32 0.0, %v1376
      %v1378 = vpop.f32.mrb[0].mxu0
      %v1379 = vadd.f32 0.0, %v1378
      %v1380 = vpop.f32.mrb[0].mxu0
      %v1381 = vadd.f32 0.0, %v1380
      %1382 = vmatprep.mubr.bf16.mxu0 0
      %1383 = vmatmul.mubr.bf16.gmra.mrb[0].mxu0 %v1219
      %v1384 = vpop.f32.mrb[0].mxu0
      %v1385 = vadd.f32 0.0, %v1384
      %v1386 = vpop.f32.mrb[0].mxu0
      %v1387 = vadd.f32 0.0, %v1386
      %v1388 = vpop.f32.mrb[0].mxu0
      %v1389 = vadd.f32 0.0, %v1388
      %v1390 = vpop.f32.mrb[0].mxu0
      %v1391 = vadd.f32 0.0, %v1390
      %1392 = vmatprep.mubr.bf16.mxu0 0
      %1393 = vmatmul.mubr.bf16.gmra.mrb[0].mxu0 %v1220
      %v1394 = vpop.f32.mrb[0].mxu0
      %v1395 = vadd.f32 0.0, %v1394
      %v1396 = vpop.f32.mrb[0].mxu0
      %v1397 = vadd.f32 0.0, %v1396
      %v1398 = vpop.f32.mrb[0].mxu0
      %v1399 = vadd.f32 0.0, %v1398
      %v1400 = vpop.f32.mrb[0].mxu0
      %v1401 = vadd.f32 0.0, %v1400
      %1402 = vmatprep.mubr.bf16.mxu0 0
      %1403 = vmatmul.mubr.bf16.gmra.mrb[0].mxu0 %v1221
      %v1404 = vpop.f32.mrb[0].mxu0
      %v1405 = vadd.f32 0.0, %v1404
      %v1406 = vpop.f32.mrb[0].mxu0
      %v1407 = vadd.f32 0.0, %v1406
      %v1408 = vpop.f32.mrb[0].mxu0
      %v1409 = vadd.f32 0.0, %v1408
      %v1410 = vpop.f32.mrb[0].mxu0
      %v1411 = vadd.f32 0.0, %v1410
      %1412 = vmatprep.mubr.bf16.mxu0 0
      %1413 = vmatmul.mubr.bf16.gmra.mrb[0].mxu0 %v1222
      %v1414 = vpop.f32.mrb[0].mxu0
      %v1415 = vadd.f32 0.0, %v1414
      %v1416 = vpop.f32.mrb[0].mxu0
      %v1417 = vadd.f32 0.0, %v1416
      %v1418 = vpop.f32.mrb[0].mxu0
      %v1419 = vadd.f32 0.0, %v1418
      %v1420 = vpop.f32.mrb[0].mxu0
      %v1421 = vadd.f32 0.0, %v1420
      %1422 = vmatprep.mubr.bf16.mxu0 0
      %1423 = vmatmul.mubr.bf16.gmra.mrb[0].mxu0 %v1223
      %v1424 = vpop.f32.mrb[0].mxu0
      %v1425 = vadd.f32 0.0, %v1424
      %v1426 = vpop.f32.mrb[0].mxu0
      %v1427 = vadd.f32 0.0, %v1426
      %v1428 = vpop.f32.mrb[0].mxu0
      %v1429 = vadd.f32 0.0, %v1428
      %v1430 = vpop.f32.mrb[0].mxu0
      %v1431 = vadd.f32 0.0, %v1430
      %1432 = vdwg.mxu0
      %v1433 = vmax.f32 %v1275, %v1277
      %1434 = vmax.xlane.f32.xlu0 %v1433
      %v1435 = vpop.xlane.xlu0 %1434
      %v1436 = vmax.f32 %v1279, %v1281
      %1437 = vmax.xlane.f32.xlu0 %v1436
      %v1438 = vpop.xlane.xlu0 %1437
      %v1439 = vmax.f32 %v1285, %v1287
      %1440 = vmax.xlane.f32.xlu0 %v1439
      %v1441 = vpop.xlane.xlu0 %1440
      %v1442 = vmax.f32 %v1289, %v1291
      %1443 = vmax.xlane.f32.xlu0 %v1442
      %v1444 = vpop.xlane.xlu0 %1443
      %v1445 = vmax.f32 %v1295, %v1297
      %1446 = vmax.xlane.f32.xlu0 %v1445
      %v1447 = vpop.xlane.xlu0 %1446
      %v1448 = vmax.f32 %v1299, %v1301
      %1449 = vmax.xlane.f32.xlu0 %v1448
      %v1450 = vpop.xlane.xlu0 %1449
      %v1451 = vmax.f32 %v1305, %v1307
      %1452 = vmax.xlane.f32.xlu0 %v1451
      %v1453 = vpop.xlane.xlu0 %1452
      %v1454 = vmax.f32 %v1309, %v1311
      %1455 = vmax.xlane.f32.xlu0 %v1454
      %v1456 = vpop.xlane.xlu0 %1455
      %v1457 = vmax.f32 %v1315, %v1317
      %1458 = vmax.xlane.f32.xlu0 %v1457
      %v1459 = vpop.xlane.xlu0 %1458
      %v1460 = vmax.f32 %v1319, %v1321
      %1461 = vmax.xlane.f32.xlu0 %v1460
      %v1462 = vpop.xlane.xlu0 %1461
      %v1463 = vmax.f32 %v1325, %v1327
      %1464 = vmax.xlane.f32.xlu0 %v1463
      %v1465 = vpop.xlane.xlu0 %1464
      %v1466 = vmax.f32 %v1329, %v1331
      %1467 = vmax.xlane.f32.xlu0 %v1466
      %v1468 = vpop.xlane.xlu0 %1467
      %v1469 = vmax.f32 %v1335, %v1337
      %1470 = vmax.xlane.f32.xlu0 %v1469
      %v1471 = vpop.xlane.xlu0 %1470
      %v1472 = vmax.f32 %v1339, %v1341
      %1473 = vmax.xlane.f32.xlu0 %v1472
      %v1474 = vpop.xlane.xlu0 %1473
      %v1475 = vmax.f32 %v1345, %v1347
      %1476 = vmax.xlane.f32.xlu0 %v1475
      %v1477 = vpop.xlane.xlu0 %1476
      %v1478 = vmax.f32 %v1349, %v1351
      %1479 = vmax.xlane.f32.xlu0 %v1478
      %v1480 = vpop.xlane.xlu0 %1479
      %v1481 = vmax.f32 %v1355, %v1357
      %1482 = vmax.xlane.f32.xlu0 %v1481
      %v1483 = vpop.xlane.xlu0 %1482
      %v1484 = vmax.f32 %v1359, %v1361
      %1485 = vmax.xlane.f32.xlu0 %v1484
      %v1486 = vpop.xlane.xlu0 %1485
      %v1487 = vmax.f32 %v1365, %v1367
      %1488 = vmax.xlane.f32.xlu0 %v1487
      %v1489 = vpop.xlane.xlu0 %1488
      %v1490 = vmax.f32 %v1369, %v1371
      %1491 = vmax.xlane.f32.xlu0 %v1490
      %v1492 = vpop.xlane.xlu0 %1491
      %v1493 = vmax.f32 %v1375, %v1377
      %1494 = vmax.xlane.f32.xlu0 %v1493
      %v1495 = vpop.xlane.xlu0 %1494
      %v1496 = vmax.f32 %v1379, %v1381
      %1497 = vmax.xlane.f32.xlu0 %v1496
      %v1498 = vpop.xlane.xlu0 %1497
      %v1499 = vmax.f32 %v1385, %v1387
      %1500 = vmax.xlane.f32.xlu0 %v1499
      %v1501 = vpop.xlane.xlu0 %1500
      %v1502 = vmax.f32 %v1389, %v1391
      %1503 = vmax.xlane.f32.xlu0 %v1502
      %v1504 = vpop.xlane.xlu0 %1503
      %v1505 = vmax.f32 %v1395, %v1397
      %1506 = vmax.xlane.f32.xlu0 %v1505
      %v1507 = vpop.xlane.xlu0 %1506
      %v1508 = vmax.f32 %v1399, %v1401
      %1509 = vmax.xlane.f32.xlu0 %v1508
      %v1510 = vpop.xlane.xlu0 %1509
      %v1511 = vmax.f32 %v1405, %v1407
      %1512 = vmax.xlane.f32.xlu0 %v1511
      %v1513 = vpop.xlane.xlu0 %1512
      %v1514 = vmax.f32 %v1409, %v1411
      %1515 = vmax.xlane.f32.xlu0 %v1514
      %v1516 = vpop.xlane.xlu0 %1515
      %v1517 = vmax.f32 %v1415, %v1417
      %1518 = vmax.xlane.f32.xlu0 %v1517
      %v1519 = vpop.xlane.xlu0 %1518
      %v1520 = vmax.f32 %v1419, %v1421
      %1521 = vmax.xlane.f32.xlu0 %v1520
      %v1522 = vpop.xlane.xlu0 %1521
      %v1523 = vmax.f32 %v1425, %v1427
      %1524 = vmax.xlane.f32.xlu0 %v1523
      %v1525 = vpop.xlane.xlu0 %1524
      %v1526 = vmax.f32 %v1429, %v1431
      %1527 = vmax.xlane.f32.xlu0 %v1526
      %v1528 = vpop.xlane.xlu0 %1527
      %v1529 = vsub.f32 %v1275, %v1435
      %v1530 = vsub.f32 %v1277, %v1435
      %v1531 = vsub.f32 %v1279, %v1438
      %v1532 = vsub.f32 %v1281, %v1438
      %v1533 = vsub.f32 %v1285, %v1441
      %v1534 = vsub.f32 %v1287, %v1441
      %v1535 = vsub.f32 %v1289, %v1444
      %v1536 = vsub.f32 %v1291, %v1444
      %v1537 = vsub.f32 %v1295, %v1447
      %v1538 = vsub.f32 %v1297, %v1447
      %v1539 = vsub.f32 %v1299, %v1450
      %v1540 = vsub.f32 %v1301, %v1450
      %v1541 = vsub.f32 %v1305, %v1453
      %v1542 = vsub.f32 %v1307, %v1453
      %v1543 = vsub.f32 %v1309, %v1456
      %v1544 = vsub.f32 %v1311, %v1456
      %v1545 = vsub.f32 %v1315, %v1459
      %v1546 = vsub.f32 %v1317, %v1459
      %v1547 = vsub.f32 %v1319, %v1462
      %v1548 = vsub.f32 %v1321, %v1462
      %v1549 = vsub.f32 %v1325, %v1465
      %v1550 = vsub.f32 %v1327, %v1465
      %v1551 = vsub.f32 %v1329, %v1468
      %v1552 = vsub.f32 %v1331, %v1468
      %v1553 = vsub.f32 %v1335, %v1471
      %v1554 = vsub.f32 %v1337, %v1471
      %v1555 = vsub.f32 %v1339, %v1474
      %v1556 = vsub.f32 %v1341, %v1474
      %v1557 = vsub.f32 %v1345, %v1477
      %v1558 = vsub.f32 %v1347, %v1477
      %v1559 = vsub.f32 %v1349, %v1480
      %v1560 = vsub.f32 %v1351, %v1480
      %v1561 = vsub.f32 %v1355, %v1483
      %v1562 = vsub.f32 %v1357, %v1483
      %v1563 = vsub.f32 %v1359, %v1486
      %v1564 = vsub.f32 %v1361, %v1486
      %v1565 = vsub.f32 %v1365, %v1489
      %v1566 = vsub.f32 %v1367, %v1489
      %v1567 = vsub.f32 %v1369, %v1492
      %v1568 = vsub.f32 %v1371, %v1492
      %v1569 = vsub.f32 %v1375, %v1495
      %v1570 = vsub.f32 %v1377, %v1495
      %v1571 = vsub.f32 %v1379, %v1498
      %v1572 = vsub.f32 %v1381, %v1498
      %v1573 = vsub.f32 %v1385, %v1501
      %v1574 = vsub.f32 %v1387, %v1501
      %v1575 = vsub.f32 %v1389, %v1504
      %v1576 = vsub.f32 %v1391, %v1504
      %v1577 = vsub.f32 %v1395, %v1507
      %v1578 = vsub.f32 %v1397, %v1507
      %v1579 = vsub.f32 %v1399, %v1510
      %v1580 = vsub.f32 %v1401, %v1510
      %v1581 = vsub.f32 %v1405, %v1513
      %v1582 = vsub.f32 %v1407, %v1513
      %v1583 = vsub.f32 %v1409, %v1516
      %v1584 = vsub.f32 %v1411, %v1516
      %v1585 = vsub.f32 %v1415, %v1519
      %v1586 = vsub.f32 %v1417, %v1519
      %v1587 = vsub.f32 %v1419, %v1522
      %v1588 = vsub.f32 %v1421, %v1522
      %v1589 = vsub.f32 %v1425, %v1525
      %v1590 = vsub.f32 %v1427, %v1525
      %v1591 = vsub.f32 %v1429, %v1528
      %v1592 = vsub.f32 %v1431, %v1528
      %v1593 = vmul.f32 %v1529, 1.442695
      %v1594 = vpow.pop %v1593
      %v1595 = vmul.f32 %v1530, 1.442695
      %v1596 = vpow.pop %v1595
      %v1597 = vmul.f32 %v1531, 1.442695
      %v1598 = vpow.pop %v1597
      %v1599 = vmul.f32 %v1532, 1.442695
      %v1600 = vpow.pop %v1599
      %v1601 = vmul.f32 %v1533, 1.442695
      %v1602 = vpow.pop %v1601
      %v1603 = vmul.f32 %v1534, 1.442695
      %v1604 = vpow.pop %v1603
      %v1605 = vmul.f32 %v1535, 1.442695
      %v1606 = vpow.pop %v1605
      %v1607 = vmul.f32 %v1536, 1.442695
      %v1608 = vpow.pop %v1607
      %v1609 = vmul.f32 %v1537, 1.442695
      %v1610 = vpow.pop %v1609
      %v1611 = vmul.f32 %v1538, 1.442695
      %v1612 = vpow.pop %v1611
      %v1613 = vmul.f32 %v1539, 1.442695
      %v1614 = vpow.pop %v1613
      %v1615 = vmul.f32 %v1540, 1.442695
      %v1616 = vpow.pop %v1615
      %v1617 = vmul.f32 %v1541, 1.442695
      %v1618 = vpow.pop %v1617
      %v1619 = vmul.f32 %v1542, 1.442695
      %v1620 = vpow.pop %v1619
      %v1621 = vmul.f32 %v1543, 1.442695
      %v1622 = vpow.pop %v1621
      %v1623 = vmul.f32 %v1544, 1.442695
      %v1624 = vpow.pop %v1623
      %v1625 = vmul.f32 %v1545, 1.442695
      %v1626 = vpow.pop %v1625
      %v1627 = vmul.f32 %v1546, 1.442695
      %v1628 = vpow.pop %v1627
      %v1629 = vmul.f32 %v1547, 1.442695
      %v1630 = vpow.pop %v1629
      %v1631 = vmul.f32 %v1548, 1.442695
      %v1632 = vpow.pop %v1631
      %v1633 = vmul.f32 %v1549, 1.442695
      %v1634 = vpow.pop %v1633
      %v1635 = vmul.f32 %v1550, 1.442695
      %v1636 = vpow.pop %v1635
      %v1637 = vmul.f32 %v1551, 1.442695
      %v1638 = vpow.pop %v1637
      %v1639 = vmul.f32 %v1552, 1.442695
      %v1640 = vpow.pop %v1639
      %v1641 = vmul.f32 %v1553, 1.442695
      %v1642 = vpow.pop %v1641
      %v1643 = vmul.f32 %v1554, 1.442695
      %v1644 = vpow.pop %v1643
      %v1645 = vmul.f32 %v1555, 1.442695
      %v1646 = vpow.pop %v1645
      %v1647 = vmul.f32 %v1556, 1.442695
      %v1648 = vpow.pop %v1647
      %v1649 = vmul.f32 %v1557, 1.442695
      %v1650 = vpow.pop %v1649
      %v1651 = vmul.f32 %v1558, 1.442695
      %v1652 = vpow.pop %v1651
      %v1653 = vmul.f32 %v1559, 1.442695
      %v1654 = vpow.pop %v1653
      %v1655 = vmul.f32 %v1560, 1.442695
      %v1656 = vpow.pop %v1655
      %v1657 = vmul.f32 %v1561, 1.442695
      %v1658 = vpow.pop %v1657
      %v1659 = vmul.f32 %v1562, 1.442695
      %v1660 = vpow.pop %v1659
      %v1661 = vmul.f32 %v1563, 1.442695
      %v1662 = vpow.pop %v1661
      %v1663 = vmul.f32 %v1564, 1.442695
      %v1664 = vpow.pop %v1663
      %v1665 = vmul.f32 %v1565, 1.442695
      %v1666 = vpow.pop %v1665
      %v1667 = vmul.f32 %v1566, 1.442695
      %v1668 = vpow.pop %v1667
      %v1669 = vmul.f32 %v1567, 1.442695
      %v1670 = vpow.pop %v1669
      %v1671 = vmul.f32 %v1568, 1.442695
      %v1672 = vpow.pop %v1671
      %v1673 = vmul.f32 %v1569, 1.442695
      %v1674 = vpow.pop %v1673
      %v1675 = vmul.f32 %v1570, 1.442695
      %v1676 = vpow.pop %v1675
      %v1677 = vmul.f32 %v1571, 1.442695
      %v1678 = vpow.pop %v1677
      %v1679 = vmul.f32 %v1572, 1.442695
      %v1680 = vpow.pop %v1679
      %v1681 = vmul.f32 %v1573, 1.442695
      %v1682 = vpow.pop %v1681
      %v1683 = vmul.f32 %v1574, 1.442695
      %v1684 = vpow.pop %v1683
      %v1685 = vmul.f32 %v1575, 1.442695
      %v1686 = vpow.pop %v1685
      %v1687 = vmul.f32 %v1576, 1.442695
      %v1688 = vpow.pop %v1687
      %v1689 = vmul.f32 %v1577, 1.442695
      %v1690 = vpow.pop %v1689
      %v1691 = vmul.f32 %v1578, 1.442695
      %v1692 = vpow.pop %v1691
      %v1693 = vmul.f32 %v1579, 1.442695
      %v1694 = vpow.pop %v1693
      %v1695 = vmul.f32 %v1580, 1.442695
      %v1696 = vpow.pop %v1695
      %v1697 = vmul.f32 %v1581, 1.442695
      %v1698 = vpow.pop %v1697
      %v1699 = vmul.f32 %v1582, 1.442695
      %v1700 = vpow.pop %v1699
      %v1701 = vmul.f32 %v1583, 1.442695
      %v1702 = vpow.pop %v1701
      %v1703 = vmul.f32 %v1584, 1.442695
      %v1704 = vpow.pop %v1703
      %v1705 = vmul.f32 %v1585, 1.442695
      %v1706 = vpow.pop %v1705
      %v1707 = vmul.f32 %v1586, 1.442695
      %v1708 = vpow.pop %v1707
      %v1709 = vmul.f32 %v1587, 1.442695
      %v1710 = vpow.pop %v1709
      %v1711 = vmul.f32 %v1588, 1.442695
      %v1712 = vpow.pop %v1711
      %v1713 = vmul.f32 %v1589, 1.442695
      %v1714 = vpow.pop %v1713
      %v1715 = vmul.f32 %v1590, 1.442695
      %v1716 = vpow.pop %v1715
      %v1717 = vmul.f32 %v1591, 1.442695
      %v1718 = vpow.pop %v1717
      %v1719 = vmul.f32 %v1592, 1.442695
      %v1720 = vpow.pop %v1719
      %v1721 = vadd.f32 %v1594, %v1596
      %1722 = vadd.xlane.f32.xlu0 %v1721
      %v1723 = vpop.xlane.xlu0 %1722
      %v1724 = vadd.f32 %v1598, %v1600
      %1725 = vadd.xlane.f32.xlu0 %v1724
      %v1726 = vpop.xlane.xlu0 %1725
      %v1727 = vadd.f32 %v1602, %v1604
      %1728 = vadd.xlane.f32.xlu0 %v1727
      %v1729 = vpop.xlane.xlu0 %1728
      %v1730 = vadd.f32 %v1606, %v1608
      %1731 = vadd.xlane.f32.xlu0 %v1730
      %v1732 = vpop.xlane.xlu0 %1731
      %v1733 = vadd.f32 %v1610, %v1612
      %1734 = vadd.xlane.f32.xlu0 %v1733
      %v1735 = vpop.xlane.xlu0 %1734
      %v1736 = vadd.f32 %v1614, %v1616
      %1737 = vadd.xlane.f32.xlu0 %v1736
      %v1738 = vpop.xlane.xlu0 %1737
      %v1739 = vadd.f32 %v1618, %v1620
      %1740 = vadd.xlane.f32.xlu0 %v1739
      %v1741 = vpop.xlane.xlu0 %1740
      %v1742 = vadd.f32 %v1622, %v1624
      %1743 = vadd.xlane.f32.xlu0 %v1742
      %v1744 = vpop.xlane.xlu0 %1743
      %v1745 = vadd.f32 %v1626, %v1628
      %1746 = vadd.xlane.f32.xlu0 %v1745
      %v1747 = vpop.xlane.xlu0 %1746
      %v1748 = vadd.f32 %v1630, %v1632
      %1749 = vadd.xlane.f32.xlu0 %v1748
      %v1750 = vpop.xlane.xlu0 %1749
      %v1751 = vadd.f32 %v1634, %v1636
      %1752 = vadd.xlane.f32.xlu0 %v1751
      %v1753 = vpop.xlane.xlu0 %1752
      %v1754 = vadd.f32 %v1638, %v1640
      %1755 = vadd.xlane.f32.xlu0 %v1754
      %v1756 = vpop.xlane.xlu0 %1755
      %v1757 = vadd.f32 %v1642, %v1644
      %1758 = vadd.xlane.f32.xlu0 %v1757
      %v1759 = vpop.xlane.xlu0 %1758
      %v1760 = vadd.f32 %v1646, %v1648
      %1761 = vadd.xlane.f32.xlu0 %v1760
      %v1762 = vpop.xlane.xlu0 %1761
      %v1763 = vadd.f32 %v1650, %v1652
      %1764 = vadd.xlane.f32.xlu0 %v1763
      %v1765 = vpop.xlane.xlu0 %1764
      %v1766 = vadd.f32 %v1654, %v1656
      %1767 = vadd.xlane.f32.xlu0 %v1766
      %v1768 = vpop.xlane.xlu0 %1767
      %v1769 = vadd.f32 %v1658, %v1660
      %1770 = vadd.xlane.f32.xlu0 %v1769
      %v1771 = vpop.xlane.xlu0 %1770
      %v1772 = vadd.f32 %v1662, %v1664
      %1773 = vadd.xlane.f32.xlu0 %v1772
      %v1774 = vpop.xlane.xlu0 %1773
      %v1775 = vadd.f32 %v1666, %v1668
      %1776 = vadd.xlane.f32.xlu0 %v1775
      %v1777 = vpop.xlane.xlu0 %1776
      %v1778 = vadd.f32 %v1670, %v1672
      %1779 = vadd.xlane.f32.xlu0 %v1778
      %v1780 = vpop.xlane.xlu0 %1779
      %v1781 = vadd.f32 %v1674, %v1676
      %1782 = vadd.xlane.f32.xlu0 %v1781
      %v1783 = vpop.xlane.xlu0 %1782
      %v1784 = vadd.f32 %v1678, %v1680
      %1785 = vadd.xlane.f32.xlu0 %v1784
      %v1786 = vpop.xlane.xlu0 %1785
      %v1787 = vadd.f32 %v1682, %v1684
      %1788 = vadd.xlane.f32.xlu0 %v1787
      %v1789 = vpop.xlane.xlu0 %1788
      %v1790 = vadd.f32 %v1686, %v1688
      %1791 = vadd.xlane.f32.xlu0 %v1790
      %v1792 = vpop.xlane.xlu0 %1791
      %v1793 = vadd.f32 %v1690, %v1692
      %1794 = vadd.xlane.f32.xlu0 %v1793
      %v1795 = vpop.xlane.xlu0 %1794
      %v1796 = vadd.f32 %v1694, %v1696
      %1797 = vadd.xlane.f32.xlu0 %v1796
      %v1798 = vpop.xlane.xlu0 %1797
      %v1799 = vadd.f32 %v1698, %v1700
      %1800 = vadd.xlane.f32.xlu0 %v1799
      %v1801 = vpop.xlane.xlu0 %1800
      %v1802 = vadd.f32 %v1702, %v1704
      %1803 = vadd.xlane.f32.xlu0 %v1802
      %v1804 = vpop.xlane.xlu0 %1803
      %v1805 = vadd.f32 %v1706, %v1708
      %1806 = vadd.xlane.f32.xlu0 %v1805
      %v1807 = vpop.xlane.xlu0 %1806
      %v1808 = vadd.f32 %v1710, %v1712
      %1809 = vadd.xlane.f32.xlu0 %v1808
      %v1810 = vpop.xlane.xlu0 %1809
      %v1811 = vadd.f32 %v1714, %v1716
      %1812 = vadd.xlane.f32.xlu0 %v1811
      %v1813 = vpop.xlane.xlu0 %1812
      %v1814 = vadd.f32 %v1718, %v1720
      %1815 = vadd.xlane.f32.xlu0 %v1814
      %v1816 = vpop.xlane.xlu0 %1815
      %v1817 = vpack.c.bf16 %v1598, %v1594
      %v1818 = vpack.c.bf16 %v1600, %v1596
      %v1819 = vpack.c.bf16 %v1606, %v1602
      %v1820 = vpack.c.bf16 %v1608, %v1604
      %v1821 = vpack.c.bf16 %v1614, %v1610
      %v1822 = vpack.c.bf16 %v1616, %v1612
      %v1823 = vpack.c.bf16 %v1622, %v1618
      %v1824 = vpack.c.bf16 %v1624, %v1620
      %v1825 = vpack.c.bf16 %v1630, %v1626
      %v1826 = vpack.c.bf16 %v1632, %v1628
      %v1827 = vpack.c.bf16 %v1638, %v1634
      %v1828 = vpack.c.bf16 %v1640, %v1636
      %v1829 = vpack.c.bf16 %v1646, %v1642
      %v1830 = vpack.c.bf16 %v1648, %v1644
      %v1831 = vpack.c.bf16 %v1654, %v1650
      %v1832 = vpack.c.bf16 %v1656, %v1652
      %v1833 = vpack.c.bf16 %v1662, %v1658
      %v1834 = vpack.c.bf16 %v1664, %v1660
      %v1835 = vpack.c.bf16 %v1670, %v1666
      %v1836 = vpack.c.bf16 %v1672, %v1668
      %v1837 = vpack.c.bf16 %v1678, %v1674
      %v1838 = vpack.c.bf16 %v1680, %v1676
      %v1839 = vpack.c.bf16 %v1686, %v1682
      %v1840 = vpack.c.bf16 %v1688, %v1684
      %v1841 = vpack.c.bf16 %v1694, %v1690
      %v1842 = vpack.c.bf16 %v1696, %v1692
      %v1843 = vpack.c.bf16 %v1702, %v1698
      %v1844 = vpack.c.bf16 %v1704, %v1700
      %v1845 = vpack.c.bf16 %v1710, %v1706
      %v1846 = vpack.c.bf16 %v1712, %v1708
      %v1847 = vpack.c.bf16 %v1718, %v1714
      %v1848 = vpack.c.bf16 %v1720, %v1716
      %v1849 = vld [vmem:[#allocation3] sm:$0xff]
      %v1850 = vld [vmem:[#allocation3 + $0x8] sm:$0xff]
      %v1851 = vld [vmem:[#allocation3 + $0x10] sm:$0xff]
      %v1852 = vld [vmem:[#allocation3 + $0x18] sm:$0xff]
      %v1853 = vld [vmem:[#allocation3 + $0x20] sm:$0xff]
      %v1854 = vld [vmem:[#allocation3 + $0x28] sm:$0xff]
      %v1855 = vld [vmem:[#allocation3 + $0x30] sm:$0xff]
      %v1856 = vld [vmem:[#allocation3 + $0x38] sm:$0xff]
      %v1857 = vld [vmem:[#allocation3 + $0x40] sm:$0xff]
      %v1858 = vld [vmem:[#allocation3 + $0x48] sm:$0xff]
      %v1859 = vld [vmem:[#allocation3 + $0x50] sm:$0xff]
      %v1860 = vld [vmem:[#allocation3 + $0x58] sm:$0xff]
      %v1861 = vld [vmem:[#allocation3 + $0x60] sm:$0xff]
      %v1862 = vld [vmem:[#allocation3 + $0x68] sm:$0xff]
      %v1863 = vld [vmem:[#allocation3 + $0x70] sm:$0xff]
      %v1864 = vld [vmem:[#allocation3 + $0x78] sm:$0xff]
      %1865 = vmatprep.subr.bf16.mxu0 0
      %1866 = vmatpush1.bf16.msra.mxu0 %v1849
      %1867 = vmatprep.subr.bf16.mxu0 0
      %1868 = vmatpush1.bf16.msra.mxu0 %v1850
      %1869 = vmatprep.subr.bf16.mxu0 0
      %1870 = vmatpush1.bf16.msra.mxu0 %v1851
      %1871 = vmatprep.subr.bf16.mxu0 0
      %1872 = vmatpush1.bf16.msra.mxu0 %v1852
      %1873 = vmatprep.subr.bf16.mxu0 0
      %1874 = vmatpush1.bf16.msra.mxu0 %v1853
      %1875 = vmatprep.subr.bf16.mxu0 0
      %1876 = vmatpush1.bf16.msra.mxu0 %v1854
      %1877 = vmatprep.subr.bf16.mxu0 0
      %1878 = vmatpush1.bf16.msra.mxu0 %v1855
      %1879 = vmatprep.subr.bf16.mxu0 0
      %1880 = vmatpush1.bf16.msra.mxu0 %v1856
      %1881 = vmatprep.subr.bf16.mxu0 0
      %1882 = vmatpush1.bf16.msra.mxu0 %v1857
      %1883 = vmatprep.subr.bf16.mxu0 0
      %1884 = vmatpush1.bf16.msra.mxu0 %v1858
      %1885 = vmatprep.subr.bf16.mxu0 0
      %1886 = vmatpush1.bf16.msra.mxu0 %v1859
      %1887 = vmatprep.subr.bf16.mxu0 0
      %1888 = vmatpush1.bf16.msra.mxu0 %v1860
      %1889 = vmatprep.subr.bf16.mxu0 0
      %1890 = vmatpush1.bf16.msra.mxu0 %v1861
      %1891 = vmatprep.subr.bf16.mxu0 0
      %1892 = vmatpush1.bf16.msra.mxu0 %v1862
      %1893 = vmatprep.subr.bf16.mxu0 0
      %1894 = vmatpush1.bf16.msra.mxu0 %v1863
      %1895 = vmatprep.subr.bf16.mxu0 0
      %1896 = vmatpush1.bf16.msra.mxu0 %v1864
      %1897 = vmatprep.mubr.bf16.mxu0 %v1818
      %1898 = vmatmul.mubr.bf16.gmra.mrb[0].mxu0 %v1817
      %v1899 = vpop.f32.mrb[0].mxu0
      %v1900 = vadd.f32 0.0, %v1899
      %v1901 = vpop.f32.mrb[0].mxu0
      %v1902 = vpop.f32.mrb[0].mxu0
      %v1903 = vadd.f32 0.0, %v1902
      %v1904 = vpop.f32.mrb[0].mxu0
      %1905 = vmatprep.mubr.bf16.mxu0 %v1820
      %1906 = vmatmul.mubr.bf16.gmra.mrb[0].mxu0 %v1819
      %v1907 = vpop.f32.mrb[0].mxu0
      %v1908 = vadd.f32 0.0, %v1907
      %v1909 = vpop.f32.mrb[0].mxu0
      %v1910 = vpop.f32.mrb[0].mxu0
      %v1911 = vadd.f32 0.0, %v1910
      %v1912 = vpop.f32.mrb[0].mxu0
      %1913 = vmatprep.mubr.bf16.mxu0 %v1822
      %1914 = vmatmul.mubr.bf16.gmra.mrb[0].mxu0 %v1821
      %v1915 = vpop.f32.mrb[0].mxu0
      %v1916 = vadd.f32 0.0, %v1915
      %v1917 = vpop.f32.mrb[0].mxu0
      %v1918 = vpop.f32.mrb[0].mxu0
      %v1919 = vadd.f32 0.0, %v1918
      %v1920 = vpop.f32.mrb[0].mxu0
      %1921 = vmatprep.mubr.bf16.mxu0 %v1824
      %1922 = vmatmul.mubr.bf16.gmra.mrb[0].mxu0 %v1823
      %v1923 = vpop.f32.mrb[0].mxu0
      %v1924 = vadd.f32 0.0, %v1923
      %v1925 = vpop.f32.mrb[0].mxu0
      %v1926 = vpop.f32.mrb[0].mxu0
      %v1927 = vadd.f32 0.0, %v1926
      %v1928 = vpop.f32.mrb[0].mxu0
      %1929 = vmatprep.mubr.bf16.mxu0 %v1826
      %1930 = vmatmul.mubr.bf16.gmra.mrb[0].mxu0 %v1825
      %v1931 = vpop.f32.mrb[0].mxu0
      %v1932 = vadd.f32 0.0, %v1931
      %v1933 = vpop.f32.mrb[0].mxu0
      %v1934 = vpop.f32.mrb[0].mxu0
      %v1935 = vadd.f32 0.0, %v1934
      %v1936 = vpop.f32.mrb[0].mxu0
      %1937 = vmatprep.mubr.bf16.mxu0 %v1828
      %1938 = vmatmul.mubr.bf16.gmra.mrb[0].mxu0 %v1827
      %v1939 = vpop.f32.mrb[0].mxu0
      %v1940 = vadd.f32 0.0, %v1939
      %v1941 = vpop.f32.mrb[0].mxu0
      %v1942 = vpop.f32.mrb[0].mxu0
      %v1943 = vadd.f32 0.0, %v1942
      %v1944 = vpop.f32.mrb[0].mxu0
      %1945 = vmatprep.mubr.bf16.mxu0 %v1830
      %1946 = vmatmul.mubr.bf16.gmra.mrb[0].mxu0 %v1829
      %v1947 = vpop.f32.mrb[0].mxu0
      %v1948 = vadd.f32 0.0, %v1947
      %v1949 = vpop.f32.mrb[0].mxu0
      %v1950 = vpop.f32.mrb[0].mxu0
      %v1951 = vadd.f32 0.0, %v1950
      %v1952 = vpop.f32.mrb[0].mxu0
      %1953 = vmatprep.mubr.bf16.mxu0 %v1832
      %1954 = vmatmul.mubr.bf16.gmra.mrb[0].mxu0 %v1831
      %v1955 = vpop.f32.mrb[0].mxu0
      %v1956 = vadd.f32 0.0, %v1955
      %v1957 = vpop.f32.mrb[0].mxu0
      %v1958 = vpop.f32.mrb[0].mxu0
      %v1959 = vadd.f32 0.0, %v1958
      %v1960 = vpop.f32.mrb[0].mxu0
      %1961 = vmatprep.mubr.bf16.mxu0 %v1834
      %1962 = vmatmul.mubr.bf16.gmra.mrb[0].mxu0 %v1833
      %v1963 = vpop.f32.mrb[0].mxu0
      %v1964 = vadd.f32 0.0, %v1963
      %v1965 = vpop.f32.mrb[0].mxu0
      %v1966 = vpop.f32.mrb[0].mxu0
      %v1967 = vadd.f32 0.0, %v1966
      %v1968 = vpop.f32.mrb[0].mxu0
      %1969 = vmatprep.mubr.bf16.mxu0 %v1836
      %1970 = vmatmul.mubr.bf16.gmra.mrb[0].mxu0 %v1835
      %v1971 = vpop.f32.mrb[0].mxu0
      %v1972 = vadd.f32 0.0, %v1971
      %v1973 = vpop.f32.mrb[0].mxu0
      %v1974 = vpop.f32.mrb[0].mxu0
      %v1975 = vadd.f32 0.0, %v1974
      %v1976 = vpop.f32.mrb[0].mxu0
      %1977 = vmatprep.mubr.bf16.mxu0 %v1838
      %1978 = vmatmul.mubr.bf16.gmra.mrb[0].mxu0 %v1837
      %v1979 = vpop.f32.mrb[0].mxu0
      %v1980 = vadd.f32 0.0, %v1979
      %v1981 = vpop.f32.mrb[0].mxu0
      %v1982 = vpop.f32.mrb[0].mxu0
      %v1983 = vadd.f32 0.0, %v1982
      %v1984 = vpop.f32.mrb[0].mxu0
      %1985 = vmatprep.mubr.bf16.mxu0 %v1840
      %1986 = vmatmul.mubr.bf16.gmra.mrb[0].mxu0 %v1839
      %v1987 = vpop.f32.mrb[0].mxu0
      %v1988 = vadd.f32 0.0, %v1987
      %v1989 = vpop.f32.mrb[0].mxu0
      %v1990 = vpop.f32.mrb[0].mxu0
      %v1991 = vadd.f32 0.0, %v1990
      %v1992 = vpop.f32.mrb[0].mxu0
      %1993 = vmatprep.mubr.bf16.mxu0 %v1842
      %1994 = vmatmul.mubr.bf16.gmra.mrb[0].mxu0 %v1841
      %v1995 = vpop.f32.mrb[0].mxu0
      %v1996 = vadd.f32 0.0, %v1995
      %v1997 = vpop.f32.mrb[0].mxu0
      %v1998 = vpop.f32.mrb[0].mxu0
      %v1999 = vadd.f32 0.0, %v1998
      %v2000 = vpop.f32.mrb[0].mxu0
      %2001 = vmatprep.mubr.bf16.mxu0 %v1844
      %2002 = vmatmul.mubr.bf16.gmra.mrb[0].mxu0 %v1843
      %v2003 = vpop.f32.mrb[0].mxu0
      %v2004 = vadd.f32 0.0, %v2003
      %v2005 = vpop.f32.mrb[0].mxu0
      %v2006 = vpop.f32.mrb[0].mxu0
      %v2007 = vadd.f32 0.0, %v2006
      %v2008 = vpop.f32.mrb[0].mxu0
      %2009 = vmatprep.mubr.bf16.mxu0 %v1846
      %2010 = vmatmul.mubr.bf16.gmra.mrb[0].mxu0 %v1845
      %v2011 = vpop.f32.mrb[0].mxu0
      %v2012 = vadd.f32 0.0, %v2011
      %v2013 = vpop.f32.mrb[0].mxu0
      %v2014 = vpop.f32.mrb[0].mxu0
      %v2015 = vadd.f32 0.0, %v2014
      %v2016 = vpop.f32.mrb[0].mxu0
      %2017 = vmatprep.mubr.bf16.mxu0 %v1848
      %2018 = vmatmul.mubr.bf16.gmra.mrb[0].mxu0 %v1847
      %v2019 = vpop.f32.mrb[0].mxu0
      %v2020 = vadd.f32 0.0, %v2019
      %v2021 = vpop.f32.mrb[0].mxu0
      %v2022 = vpop.f32.mrb[0].mxu0
      %v2023 = vadd.f32 0.0, %v2022
      %v2024 = vpop.f32.mrb[0].mxu0
      %2025 = vdwg.mxu0
      %v2026 = vrcp.pop %v1723
      %v2027 = vrcp.pop %v1726
      %v2028 = vrcp.pop %v1729
      %v2029 = vrcp.pop %v1732
      %v2030 = vrcp.pop %v1735
      %v2031 = vrcp.pop %v1738
      %v2032 = vrcp.pop %v1741
      %v2033 = vrcp.pop %v1744
      %v2034 = vrcp.pop %v1747
      %v2035 = vrcp.pop %v1750
      %v2036 = vrcp.pop %v1753
      %v2037 = vrcp.pop %v1756
      %v2038 = vrcp.pop %v1759
      %v2039 = vrcp.pop %v1762
      %v2040 = vrcp.pop %v1765
      %v2041 = vrcp.pop %v1768
      %v2042 = vrcp.pop %v1771
      %v2043 = vrcp.pop %v1774
      %v2044 = vrcp.pop %v1777
      %v2045 = vrcp.pop %v1780
      %v2046 = vrcp.pop %v1783
      %v2047 = vrcp.pop %v1786
      %v2048 = vrcp.pop %v1789
      %v2049 = vrcp.pop %v1792
      %v2050 = vrcp.pop %v1795
      %v2051 = vrcp.pop %v1798
      %v2052 = vrcp.pop %v1801
      %v2053 = vrcp.pop %v1804
      %v2054 = vrcp.pop %v1807
      %v2055 = vrcp.pop %v1810
      %v2056 = vrcp.pop %v1813
      %v2057 = vrcp.pop %v1816
      %v2058 = vmul.f32 %v1900, %v2026
      %v2059 = vmul.f32 %v1903, %v2027
      %v2060 = vmul.f32 %v1908, %v2028
      %v2061 = vmul.f32 %v1911, %v2029
      %v2062 = vmul.f32 %v1916, %v2030
      %v2063 = vmul.f32 %v1919, %v2031
      %v2064 = vmul.f32 %v1924, %v2032
      %v2065 = vmul.f32 %v1927, %v2033
      %v2066 = vmul.f32 %v1932, %v2034
      %v2067 = vmul.f32 %v1935, %v2035
      %v2068 = vmul.f32 %v1940, %v2036
      %v2069 = vmul.f32 %v1943, %v2037
      %v2070 = vmul.f32 %v1948, %v2038
      %v2071 = vmul.f32 %v1951, %v2039
      %v2072 = vmul.f32 %v1956, %v2040
      %v2073 = vmul.f32 %v1959, %v2041
      %v2074 = vmul.f32 %v1964, %v2042
      %v2075 = vmul.f32 %v1967, %v2043
      %v2076 = vmul.f32 %v1972, %v2044
      %v2077 = vmul.f32 %v1975, %v2045
      %v2078 = vmul.f32 %v1980, %v2046
      %v2079 = vmul.f32 %v1983, %v2047
      %v2080 = vmul.f32 %v1988, %v2048
      %v2081 = vmul.f32 %v1991, %v2049
      %v2082 = vmul.f32 %v1996, %v2050
      %v2083 = vmul.f32 %v1999, %v2051
      %v2084 = vmul.f32 %v2004, %v2052
      %v2085 = vmul.f32 %v2007, %v2053
      %v2086 = vmul.f32 %v2012, %v2054
      %v2087 = vmul.f32 %v2015, %v2055
      %v2088 = vmul.f32 %v2020, %v2056
      %v2089 = vmul.f32 %v2023, %v2057
      %s2090 = sld [smem:[#allocation4]]
      %v2091 = vstv %s2090
      %v2092 = vmul.f32 %v2091, %v2058
      %v2093 = vmul.f32 %v2091, %v2059
      %v2094 = vmul.f32 %v2091, %v2060
      %v2095 = vmul.f32 %v2091, %v2061
      %v2096 = vmul.f32 %v2091, %v2062
      %v2097 = vmul.f32 %v2091, %v2063
      %v2098 = vmul.f32 %v2091, %v2064
      %v2099 = vmul.f32 %v2091, %v2065
      %v2100 = vmul.f32 %v2091, %v2066
      %v2101 = vmul.f32 %v2091, %v2067
      %v2102 = vmul.f32 %v2091, %v2068
      %v2103 = vmul.f32 %v2091, %v2069
      %v2104 = vmul.f32 %v2091, %v2070
      %v2105 = vmul.f32 %v2091, %v2071
      %v2106 = vmul.f32 %v2091, %v2072
      %v2107 = vmul.f32 %v2091, %v2073
      %v2108 = vmul.f32 %v2091, %v2074
      %v2109 = vmul.f32 %v2091, %v2075
      %v2110 = vmul.f32 %v2091, %v2076
      %v2111 = vmul.f32 %v2091, %v2077
      %v2112 = vmul.f32 %v2091, %v2078
      %v2113 = vmul.f32 %v2091, %v2079
      %v2114 = vmul.f32 %v2091, %v2080
      %v2115 = vmul.f32 %v2091, %v2081
      %v2116 = vmul.f32 %v2091, %v2082
      %v2117 = vmul.f32 %v2091, %v2083
      %v2118 = vmul.f32 %v2091, %v2084
      %v2119 = vmul.f32 %v2091, %v2085
      %v2120 = vmul.f32 %v2091, %v2086
      %v2121 = vmul.f32 %v2091, %v2087
      %v2122 = vmul.f32 %v2091, %v2088
      %v2123 = vmul.f32 %v2091, %v2089
      %v2124 = vadd.f32 %v2092, %v927
      %v2125 = vadd.f32 %v2093, %v928
      %v2126 = vadd.f32 %v2094, %v929
      %v2127 = vadd.f32 %v2095, %v930
      %v2128 = vadd.f32 %v2096, %v931
      %v2129 = vadd.f32 %v2097, %v932
      %v2130 = vadd.f32 %v2098, %v933
      %v2131 = vadd.f32 %v2099, %v934
      %v2132 = vadd.f32 %v2100, %v935
      %v2133 = vadd.f32 %v2101, %v936
      %v2134 = vadd.f32 %v2102, %v937
      %v2135 = vadd.f32 %v2103, %v938
      %v2136 = vadd.f32 %v2104, %v939
      %v2137 = vadd.f32 %v2105, %v940
      %v2138 = vadd.f32 %v2106, %v941
      %v2139 = vadd.f32 %v2107, %v942
      %v2140 = vadd.f32 %v2108, %v943
      %v2141 = vadd.f32 %v2109, %v944
      %v2142 = vadd.f32 %v2110, %v945
      %v2143 = vadd.f32 %v2111, %v946
      %v2144 = vadd.f32 %v2112, %v947
      %v2145 = vadd.f32 %v2113, %v948
      %v2146 = vadd.f32 %v2114, %v949
      %v2147 = vadd.f32 %v2115, %v950
      %v2148 = vadd.f32 %v2116, %v951
      %v2149 = vadd.f32 %v2117, %v952
      %v2150 = vadd.f32 %v2118, %v953
      %v2151 = vadd.f32 %v2119, %v954
      %v2152 = vadd.f32 %v2120, %v955
      %v2153 = vadd.f32 %v2121, %v956
      %v2154 = vadd.f32 %v2122, %v957
      %v2155 = vadd.f32 %v2123, %v958
      %2156 = vst.msk [vmem:[%s391] sm:$0xff] %vm998, %v2124
      %2157 = vst.msk [vmem:[%s391 + $0x8] sm:$0xff] %vm998, %v2125
      %2158 = vst.msk [vmem:[%s391 + $0x10] sm:$0xff] %vm998, %v2126
      %2159 = vst.msk [vmem:[%s391 + $0x18] sm:$0xff] %vm998, %v2127
      %2160 = vst.msk [vmem:[%s391 + $0x20] sm:$0xff] %vm998, %v2128
      %2161 = vst.msk [vmem:[%s391 + $0x28] sm:$0xff] %vm998, %v2129
      %2162 = vst.msk [vmem:[%s391 + $0x30] sm:$0xff] %vm998, %v2130
      %2163 = vst.msk [vmem:[%s391 + $0x38] sm:$0xff] %vm998, %v2131
      %2164 = vst.msk [vmem:[%s391 + $0x40] sm:$0xff] %vm998, %v2132
      %2165 = vst.msk [vmem:[%s391 + $0x48] sm:$0xff] %vm998, %v2133
      %2166 = vst.msk [vmem:[%s391 + $0x50] sm:$0xff] %vm998, %v2134
      %2167 = vst.msk [vmem:[%s391 + $0x58] sm:$0xff] %vm998, %v2135
      %2168 = vst.msk [vmem:[%s391 + $0x60] sm:$0xff] %vm998, %v2136
      %2169 = vst.msk [vmem:[%s391 + $0x68] sm:$0xff] %vm998, %v2137
      %2170 = vst.msk [vmem:[%s391 + $0x70] sm:$0xff] %vm998, %v2138
      %2171 = vst.msk [vmem:[%s391 + $0x78] sm:$0xff] %vm998, %v2139
      %2172 = vst.msk [vmem:[%s391 + $0x80] sm:$0xff] %vm998, %v2140
      %2173 = vst.msk [vmem:[%s391 + $0x88] sm:$0xff] %vm998, %v2141
      %2174 = vst.msk [vmem:[%s391 + $0x90] sm:$0xff] %vm998, %v2142
      %2175 = vst.msk [vmem:[%s391 + $0x98] sm:$0xff] %vm998, %v2143
      %2176 = vst.msk [vmem:[%s391 + $0xa0] sm:$0xff] %vm998, %v2144
      %2177 = vst.msk [vmem:[%s391 + $0xa8] sm:$0xff] %vm998, %v2145
      %2178 = vst.msk [vmem:[%s391 + $0xb0] sm:$0xff] %vm998, %v2146
      %2179 = vst.msk [vmem:[%s391 + $0xb8] sm:$0xff] %vm998, %v2147
      %2180 = vst.msk [vmem:[%s391 + $0xc0] sm:$0xff] %vm998, %v2148
      %2181 = vst.msk [vmem:[%s391 + $0xc8] sm:$0xff] %vm998, %v2149
      %2182 = vst.msk [vmem:[%s391 + $0xd0] sm:$0xff] %vm998, %v2150
      %2183 = vst.msk [vmem:[%s391 + $0xd8] sm:$0xff] %vm998, %v2151
      %2184 = vst.msk [vmem:[%s391 + $0xe0] sm:$0xff] %vm998, %v2152
      %2185 = vst.msk [vmem:[%s391 + $0xe8] sm:$0xff] %vm998, %v2153
      %2186 = vst.msk [vmem:[%s391 + $0xf0] sm:$0xff] %vm998, %v2154
      %2187 = vst.msk [vmem:[%s391 + $0xf8] sm:$0xff] %vm998, %v2155
      %s2188 = smul.u32 32, %s26
      %p2189 = scmp.lt.s32.totalorder %s25, 1
      %s2190 = scalar_select %p2189, %s25, 1
      %p2191 = scmp.lt.s32.totalorder %s2188, 31
      %s2192 = scalar_select %p2191, %s2188, 31
      %s2193 = smul.addr %s2190, 32
      %s2194 = sadd.s32 %s2192, %s2193
      %s2195 = smul.addr %s2194, 8
      %s2196 = scalar_lea.vmem %s9, %s2195
      // Predicated region
      $region61: #{tpu_custom_call.1} parent=55 // pred_check
        %p2197 = pneg %p254
      $region62: #{tpu_custom_call.1} parent=55 // pred_check_branch
        %2199 = sbr.rel (%p2197) target = $region64
      $region63: #{tpu_custom_call.1} parent=55 // pred_region
        %s2200 = smul.u32 32, %s26
      $region64: #{tpu_custom_call.1} parent=55 // pred_fallthru
        _
    $region56: #{tpu_custom_call.1} parent=5 // pred_fallthru
      _
    %p2201 = scmp.le.s32.totalorder 2, %s16
    // Predicated region
    $region65: #{tpu_custom_call.1} parent=5 // pred_check
      %p2202 = pneg %p2201
    $region66: #{tpu_custom_call.1} parent=5 // pred_check_branch
      %2204 = sbr.rel (%p2202) target = $region68
    $region67: #{tpu_custom_call.1} parent=5 // pred_region
      %s2205 = ssub.s32 %s16, 2
      // Predicated region
      $region69: #{tpu_custom_call.1} parent=67 // pred_check
        %p2206 = pneg %p260
      $region70: #{tpu_custom_call.1} parent=67 // pred_check_branch
        %2208 = sbr.rel (%p2206) target = $region72
      $region71: #{tpu_custom_call.1} parent=67 // pred_region
        %s2209 = smul.u32 32, %s28
        %p2210 = scmp.lt.s32.totalorder %s27, 1
        %s2211 = scalar_select %p2210, %s27, 1
        %p2212 = scmp.lt.s32.totalorder %s2209, 31
        %s2213 = scalar_select %p2212, %s2209, 31
        %s2214 = smul.addr %s2211, 32
        %s2215 = sadd.s32 %s2213, %s2214
        %s2216 = smul.addr %s2215, 8
        %s2217 = scalar_lea.vmem %s9, %s2216
      $region72: #{tpu_custom_call.1} parent=67 // pred_fallthru
        _
    $region68: #{tpu_custom_call.1} parent=5 // pred_fallthru
      _
  $region6: #{tpu_custom_call.1} parent=0 // loop_footer
    %s20 = sadd.s32 1, %s16
  $region7: #{tpu_custom_call.1} parent=0 // loop_footer_branch
    %15 = sbr.rel target = $region3
  $region8: #{tpu_custom_call.1} parent=0 // loop_exit
    _

</llo_original>
